<compile_context>
chip_gen: v5e
topology: v5e:2x2
jax: 0.10.0
libtpu: 0.0.40
codegen_flags: <defaults>
</compile_context>

<pallas_src>
import math

import jax
import jax.numpy as jnp
from jax.experimental import pallas as pl
from jax.experimental.pallas import tpu as pltpu

# ----- model config (consistent with the module's constructor) --------------
D_MODEL = 32
NHEAD = 4
HEAD_DIM = D_MODEL // NHEAD
DIM_FF = 64
EPS = 1e-5

T_TGT = 8     # tgt sequence length
S_MEM = 10    # memory (encoder) sequence length
BATCH = 2

_SCALE = 1.0 / math.sqrt(HEAD_DIM)
_NEG_BIG = -1e30

# slab32 row offsets
_W2_ROW = 3 * D_MODEL                 # 96
_VEC_ROW = _W2_ROW + DIM_FF           # 160
_SLAB32_ROWS = _VEC_ROW + 10          # 170


# ----- in-kernel math helpers -------------------------------------------------
def _layer_norm(x, w, b):
    mu = jnp.mean(x, axis=-1, keepdims=True)
    var = jnp.mean((x - mu) ** 2, axis=-1, keepdims=True)
    return (x - mu) * jax.lax.rsqrt(var + EPS) * w + b


def _cross_batch_mask(rows_q, rows_k):
    """Additive mask: 0 where query row and key row belong to the same batch
    element (row index % BATCH), -1e30 otherwise.  Lets all batch elements be
    processed in one fused (rows, D) block while keeping attention strictly
    per-batch."""
    ri = jax.lax.broadcasted_iota(jnp.int32, (rows_q, rows_k), 0)
    ci = jax.lax.broadcasted_iota(jnp.int32, (rows_q, rows_k), 1)
    if (BATCH & (BATCH - 1)) == 0:     # power-of-two batch: cheap bitwise path
        same = jnp.bitwise_and(ri, BATCH - 1) == jnp.bitwise_and(ci, BATCH - 1)
    else:
        same = (ri % BATCH) == (ci % BATCH)
    return jnp.where(same, jnp.float32(0.0), jnp.float32(_NEG_BIG))


def _mha_core(q, k, v, add_mask):
    """Multi-head attention core on fused-batch rows.

    q: (Rq, D); k, v: (Rk, D); add_mask: (Rq, Rk).  Returns (Rq, D) = the
    per-head contexts lane-concatenated (ready for a single out-proj dot)."""
    f32 = jnp.float32
    ctx = []
    for h in range(NHEAD):             # static loop: NHEAD tiny 2D matmuls
        lo = h * HEAD_DIM
        hi = lo + HEAD_DIM
        qh = q[:, lo:hi]
        kh = k[:, lo:hi]
        vh = v[:, lo:hi]
        # scores: contract the head dim of both operands (q @ k^T without an
        # explicit in-kernel transpose).
        s = jax.lax.dot_general(qh, kh, (((1,), (1,)), ((), ())),
                                preferred_element_type=f32)
        s = s * _SCALE + add_mask
        s = s - jnp.max(s, axis=-1, keepdims=True)
        e = jnp.exp(s)
        a = e / jnp.sum(e, axis=-1, keepdims=True)   # exact softmax divide
        ctx.append(jnp.dot(a, vh, preferred_element_type=f32))
    return jnp.concatenate(ctx, axis=-1)             # (Rq, D)


# ----- Pallas kernel ----------------------------------------------------------
def decoder_layer_kernel(x_ref, m_ref, w96_ref, w64_ref, w32_ref, out_ref):
    f32 = jnp.float32
    d = D_MODEL
    rq = x_ref.shape[0]                # T*B
    rk = m_ref.shape[0]                # S*B

    # ---- weights: pure sublane (row) slices of the packed slabs -------------
    sa_wqkv = w96_ref[0:d, :]                    # (D, 3D)  fused self-attn QKV
    sa_bqkv = w96_ref[d:d + 1, :]                # (1, 3D)

    ca_wkv = w64_ref[0:d, :]                     # (D, 2D)  fused cross-attn K|V
    w1 = w64_ref[d:2 * d, :]                     # (D, FF)
    ca_bkv = w64_ref[2 * d:2 * d + 1, :]         # (1, 2D)
    b1 = w64_ref[2 * d + 1:2 * d + 2, :]         # (1, FF)

    ca_wq = w32_ref[0:d, :]                      # (D, D)
    sa_wo = w32_ref[d:2 * d, :]                  # (D, D)
    ca_wo = w32_ref[2 * d:3 * d, :]              # (D, D)
    w2 = w32_ref[_W2_ROW:_W2_ROW + DIM_FF, :]    # (FF, D)

    def vec(i):                                  # (1, D) vector row
        r = _VEC_ROW + i
        return w32_ref[r:r + 1, :]

    ca_bq, sa_bo, ca_bo, b2 = vec(0), vec(1), vec(2), vec(3)
    n1w, n1b, n2w, n2b, n3w, n3b = vec(4), vec(5), vec(6), vec(7), vec(8), vec(9)

    x = x_ref[...].astype(f32)                   # (T*B, D) fused rows
    m = m_ref[...].astype(f32)                   # (S*B, D) fused rows

    self_mask = _cross_batch_mask(rq, rq)
    mem_mask = _cross_batch_mask(rq, rk)

    # ---- self-attention: one fused QKV matmul + one out-proj matmul ---------
    qkv = jnp.dot(x, sa_wqkv, preferred_element_type=f32) + sa_bqkv    # (Rq, 3D)
    sa = _mha_core(qkv[:, 0:d], qkv[:, d:2 * d], qkv[:, 2 * d:3 * d], self_mask)
    sa = jnp.dot(sa, sa_wo, preferred_element_type=f32) + sa_bo
    x = _layer_norm(x + sa, n1w, n1b)

    # ---- cross-attention: Q matmul + fused K|V matmul + one out-proj --------
    q = jnp.dot(x, ca_wq, preferred_element_type=f32) + ca_bq          # (Rq, D)
    kv = jnp.dot(m, ca_wkv, preferred_element_type=f32) + ca_bkv       # (Rk, 2D)
    ca = _mha_core(q, kv[:, 0:d], kv[:, d:2 * d], mem_mask)
    ca = jnp.dot(ca, ca_wo, preferred_element_type=f32) + ca_bo
    x = _layer_norm(x + ca, n2w, n2b)

    # ---- feed-forward --------------------------------------------------------
    h = jnp.maximum(jnp.dot(x, w1, preferred_element_type=f32) + b1, 0.0)
    ff = jnp.dot(h, w2, preferred_element_type=f32) + b2
    x = _layer_norm(x + ff, n3w, n3b)

    out_ref[...] = x.astype(out_ref.dtype)       # single dense (T*B, D) store


# ----- wrapper ----------------------------------------------------------------
def pack_params(p):
    """One-time repack of the 18 PyTorch-layout parameters into three slabs,
    grouped by lane width (96 / 64 / 32) so the kernel only ever takes row
    slices (no lane slicing of weights, no in-kernel transposes)."""
    d = D_MODEL
    f32 = jnp.float32
    t = lambda w: jnp.asarray(w, f32).T
    a = lambda w: jnp.asarray(w, f32)

    # (33, 96): fused self-attn QKV weight (pre-transposed) + bias
    slab96 = jnp.concatenate([t(p["sa_in_w"]), a(p["sa_in_b"])], axis=0)

    # (66, 64): cross-attn K|V weight, lin1 weight, their biases
    slab64 = jnp.concatenate([
        t(p["ca_in_w"][d:]),             # (32, 64)
        t(p["lin1_w"]),                  # (32, 64)
        a(p["ca_in_b"][:, d:]),          # (1, 64)
        a(p["lin1_b"]),                  # (1, 64)
    ], axis=0)

    # (170, 32): remaining 32-wide matrices + all 32-wide vectors
    slab32 = jnp.concatenate([
        t(p["ca_in_w"][:d]),             # (32, 32) cross-attn Q weight
        t(p["sa_out_w"]),                # (32, 32)
        t(p["ca_out_w"]),                # (32, 32)
        t(p["lin2_w"]),                  # (64, 32)
        a(p["ca_in_b"][:, :d]), a(p["sa_out_b"]), a(p["ca_out_b"]), a(p["lin2_b"]),
        a(p["n1_w"]), a(p["n1_b"]), a(p["n2_w"]), a(p["n2_b"]),
        a(p["n3_w"]), a(p["n3_b"]),
    ], axis=0)

    assert slab96.shape == (D_MODEL + 1, 3 * D_MODEL)
    assert slab64.shape == (2 * D_MODEL + 2, 2 * D_MODEL)
    assert slab32.shape == (_SLAB32_ROWS, D_MODEL)
    return slab96, slab64, slab32


def transformer_decoder_layer(tgt, memory, slab96, slab64, slab32):
    """tgt: (T, B, D), memory: (S, B, D) -> (T, B, D).
    Inputs/outputs cross the kernel boundary as free row-major reshapes
    (T*B, D) / (S*B, D); no layout transposes anywhere."""
    T, B, D = tgt.shape
    S = memory.shape[0]
    x2d = tgt.reshape(T * B, D)
    m2d = memory.reshape(S * B, D)

    def spec2d(shape):
        return pl.BlockSpec(shape, lambda i: (0, 0))

    out2d = pl.pallas_call(
        decoder_layer_kernel,
        out_shape=jax.ShapeDtypeStruct((T * B, D), tgt.dtype),
        grid_spec=pltpu.PrefetchScalarGridSpec(
            num_scalar_prefetch=0,
            grid=(1,),
            in_specs=[spec2d(x2d.shape), spec2d(m2d.shape),
                      spec2d(slab96.shape), spec2d(slab64.shape),
                      spec2d(slab32.shape)],
            out_specs=spec2d((T * B, D)),
        ),
        compiler_params=pltpu.CompilerParams(dimension_semantics=("arbitrary",)),
    )(x2d, m2d, slab96, slab64, slab32)
    return out2d.reshape(T, B, D)


# ----- deterministic parameter init (PyTorch parameter layout) ----------------
def init_params(key):
    ks = jax.random.split(key, 12)
    s = 0.05
    return {
        "sa_in_w": jax.random.normal(ks[0], (3 * D_MODEL, D_MODEL), jnp.float32) * s,
        "sa_in_b": jax.random.normal(ks[1], (1, 3 * D_MODEL), jnp.float32) * s,
        "sa_out_w": jax.random.normal(ks[2], (D_MODEL, D_MODEL), jnp.float32) * s,
        "sa_out_b": jax.random.normal(ks[3], (1, D_MODEL), jnp.float32) * s,
        "ca_in_w": jax.random.normal(ks[4], (3 * D_MODEL, D_MODEL), jnp.float32) * s,
        "ca_in_b": jax.random.normal(ks[5], (1, 3 * D_MODEL), jnp.float32) * s,
        "ca_out_w": jax.random.normal(ks[6], (D_MODEL, D_MODEL), jnp.float32) * s,
        "ca_out_b": jax.random.normal(ks[7], (1, D_MODEL), jnp.float32) * s,
        "lin1_w": jax.random.normal(ks[8], (DIM_FF, D_MODEL), jnp.float32) * s,
        "lin1_b": jax.random.normal(ks[9], (1, DIM_FF), jnp.float32) * s,
        "lin2_w": jax.random.normal(ks[10], (D_MODEL, DIM_FF), jnp.float32) * s,
        "lin2_b": jax.random.normal(ks[11], (1, D_MODEL), jnp.float32) * s,
        "n1_w": jnp.ones((1, D_MODEL), jnp.float32),
        "n1_b": jnp.zeros((1, D_MODEL), jnp.float32),
        "n2_w": jnp.ones((1, D_MODEL), jnp.float32),
        "n2_b": jnp.zeros((1, D_MODEL), jnp.float32),
        "n3_w": jnp.ones((1, D_MODEL), jnp.float32),
        "n3_b": jnp.zeros((1, D_MODEL), jnp.float32),
    }


# ----- pure-JAX reference (PyTorch eval semantics, unpacked params) -----------
def reference_decoder(tgt, memory, p):
    d = D_MODEL

    def ln(x, w, b):
        mu = x.mean(-1, keepdims=True)
        var = ((x - mu) ** 2).mean(-1, keepdims=True)
        return (x - mu) / jnp.sqrt(var + EPS) * w + b

    def mha(q_in, kv_in, in_w, in_b, out_w, out_b):
        hd = d // NHEAD
        q = q_in @ in_w[:d].T + in_b[:, :d]
        k = kv_in @ in_w[d:2 * d].T + in_b[:, d:2 * d]
        v = kv_in @ in_w[2 * d:].T + in_b[:, 2 * d:]
        outs = []
        for h in range(NHEAD):
            sl = slice(h * hd, (h + 1) * hd)
            sc = (q[:, sl] @ k[:, sl].T) / math.sqrt(hd)
            a = jax.nn.softmax(sc, axis=-1)
            outs.append(a @ v[:, sl])
        o = jnp.concatenate(outs, axis=-1)
        return o @ out_w.T + out_b

    ys = []
    for b in range(tgt.shape[1]):
        x = tgt[:, b, :]
        m = memory[:, b, :]
        x = ln(x + mha(x, x, p["sa_in_w"], p["sa_in_b"], p["sa_out_w"], p["sa_out_b"]),
               p["n1_w"], p["n1_b"])
        x = ln(x + mha(x, m, p["ca_in_w"], p["ca_in_b"], p["ca_out_w"], p["ca_out_b"]),
               p["n2_w"], p["n2_b"])
        h = jax.nn.relu(x @ p["lin1_w"].T + p["lin1_b"])
        x = ln(x + h @ p["lin2_w"].T + p["lin2_b"], p["n3_w"], p["n3_b"])
        ys.append(x)
    return jnp.stack(ys, axis=1)


if __name__ == "__main__":
    key = jax.random.PRNGKey(0)
    kp, kt, km = jax.random.split(key, 3)
    params = init_params(kp)
    tgt = jax.random.normal(kt, (T_TGT, BATCH, D_MODEL), jnp.float32)
    memory = jax.random.normal(km, (S_MEM, BATCH, D_MODEL), jnp.float32)

    slab96, slab64, slab32 = pack_params(params)   # one-time weight repack
    decoder = jax.jit(transformer_decoder_layer)
    out = decoder(tgt, memory, slab96, slab64, slab32)
    out = jax.block_until_ready(out)

    ref = reference_decoder(tgt, memory, params)
    assert out.shape == (T_TGT, BATCH, D_MODEL)
    assert jnp.allclose(out, ref, atol=1e-3, rtol=1e-3), "mismatch vs reference"

    print("KERNEL_OK")
</pallas_src>

<mosaic_0001>
module attributes {stable_mosaic.version = 11 : i64} {
  func.func @decoder_layer_kernel(%arg0: i32, %arg1: memref<16x32xf32, #tpu.memory_space<vmem>>, %arg2: memref<20x32xf32, #tpu.memory_space<vmem>>, %arg3: memref<33x96xf32, #tpu.memory_space<vmem>>, %arg4: memref<66x64xf32, #tpu.memory_space<vmem>>, %arg5: memref<170x32xf32, #tpu.memory_space<vmem>>, %arg6: memref<16x32xf32, #tpu.memory_space<vmem>>) attributes {dimension_semantics = [#tpu.dimension_semantics<arbitrary>], iteration_bounds = array<i64: 1>, scalar_prefetch = 0 : i64, scratch_operands = 0 : i64, tpu.core_type = #tpu.core_type<tc>, window_params = [{pipeline_mode = #tpu.pipeline_mode<synchronous>, transform_indices = @transform_0, window_bounds = array<i64: 16, 32>}, {pipeline_mode = #tpu.pipeline_mode<synchronous>, transform_indices = @transform_1, window_bounds = array<i64: 20, 32>}, {pipeline_mode = #tpu.pipeline_mode<synchronous>, transform_indices = @transform_2, window_bounds = array<i64: 33, 96>}, {pipeline_mode = #tpu.pipeline_mode<synchronous>, transform_indices = @transform_3, window_bounds = array<i64: 66, 64>}, {pipeline_mode = #tpu.pipeline_mode<synchronous>, transform_indices = @transform_4, window_bounds = array<i64: 170, 32>}, {pipeline_mode = #tpu.pipeline_mode<synchronous>, transform_indices = @transform_5, window_bounds = array<i64: 16, 32>}]} {
    %c0 = arith.constant 0 : index
    %c0_0 = arith.constant 0 : index
    %0 = vector.load %arg3[%c0, %c0_0] : memref<33x96xf32, #tpu.memory_space<vmem>>, vector<32x96xf32>
    %c32 = arith.constant 32 : index
    %c0_1 = arith.constant 0 : index
    %1 = vector.load %arg3[%c32, %c0_1] : memref<33x96xf32, #tpu.memory_space<vmem>>, vector<1x96xf32>
    %c0_2 = arith.constant 0 : index
    %c0_3 = arith.constant 0 : index
    %2 = vector.load %arg4[%c0_2, %c0_3] : memref<66x64xf32, #tpu.memory_space<vmem>>, vector<32x64xf32>
    %c32_4 = arith.constant 32 : index
    %c0_5 = arith.constant 0 : index
    %3 = vector.load %arg4[%c32_4, %c0_5] : memref<66x64xf32, #tpu.memory_space<vmem>>, vector<32x64xf32>
    %c64 = arith.constant 64 : index
    %c0_6 = arith.constant 0 : index
    %4 = vector.load %arg4[%c64, %c0_6] : memref<66x64xf32, #tpu.memory_space<vmem>>, vector<1x64xf32>
    %c65 = arith.constant 65 : index
    %c0_7 = arith.constant 0 : index
    %5 = vector.load %arg4[%c65, %c0_7] : memref<66x64xf32, #tpu.memory_space<vmem>>, vector<1x64xf32>
    %c0_8 = arith.constant 0 : index
    %c0_9 = arith.constant 0 : index
    %6 = vector.load %arg5[%c0_8, %c0_9] : memref<170x32xf32, #tpu.memory_space<vmem>>, vector<32x32xf32>
    %c32_10 = arith.constant 32 : index
    %c0_11 = arith.constant 0 : index
    %7 = vector.load %arg5[%c32_10, %c0_11] : memref<170x32xf32, #tpu.memory_space<vmem>>, vector<32x32xf32>
    %c64_12 = arith.constant 64 : index
    %c0_13 = arith.constant 0 : index
    %8 = vector.load %arg5[%c64_12, %c0_13] : memref<170x32xf32, #tpu.memory_space<vmem>>, vector<32x32xf32>
    %c96 = arith.constant 96 : index
    %c0_14 = arith.constant 0 : index
    %9 = vector.load %arg5[%c96, %c0_14] : memref<170x32xf32, #tpu.memory_space<vmem>>, vector<64x32xf32>
    %c160 = arith.constant 160 : index
    %c0_15 = arith.constant 0 : index
    %10 = vector.load %arg5[%c160, %c0_15] : memref<170x32xf32, #tpu.memory_space<vmem>>, vector<1x32xf32>
    %c161 = arith.constant 161 : index
    %c0_16 = arith.constant 0 : index
    %11 = vector.load %arg5[%c161, %c0_16] : memref<170x32xf32, #tpu.memory_space<vmem>>, vector<1x32xf32>
    %c162 = arith.constant 162 : index
    %c0_17 = arith.constant 0 : index
    %12 = vector.load %arg5[%c162, %c0_17] : memref<170x32xf32, #tpu.memory_space<vmem>>, vector<1x32xf32>
    %c163 = arith.constant 163 : index
    %c0_18 = arith.constant 0 : index
    %13 = vector.load %arg5[%c163, %c0_18] : memref<170x32xf32, #tpu.memory_space<vmem>>, vector<1x32xf32>
    %c164 = arith.constant 164 : index
    %c0_19 = arith.constant 0 : index
    %14 = vector.load %arg5[%c164, %c0_19] : memref<170x32xf32, #tpu.memory_space<vmem>>, vector<1x32xf32>
    %c165 = arith.constant 165 : index
    %c0_20 = arith.constant 0 : index
    %15 = vector.load %arg5[%c165, %c0_20] : memref<170x32xf32, #tpu.memory_space<vmem>>, vector<1x32xf32>
    %c166 = arith.constant 166 : index
    %c0_21 = arith.constant 0 : index
    %16 = vector.load %arg5[%c166, %c0_21] : memref<170x32xf32, #tpu.memory_space<vmem>>, vector<1x32xf32>
    %c167 = arith.constant 167 : index
    %c0_22 = arith.constant 0 : index
    %17 = vector.load %arg5[%c167, %c0_22] : memref<170x32xf32, #tpu.memory_space<vmem>>, vector<1x32xf32>
    %c168 = arith.constant 168 : index
    %c0_23 = arith.constant 0 : index
    %18 = vector.load %arg5[%c168, %c0_23] : memref<170x32xf32, #tpu.memory_space<vmem>>, vector<1x32xf32>
    %c169 = arith.constant 169 : index
    %c0_24 = arith.constant 0 : index
    %19 = vector.load %arg5[%c169, %c0_24] : memref<170x32xf32, #tpu.memory_space<vmem>>, vector<1x32xf32>
    %c0_25 = arith.constant 0 : index
    %c0_26 = arith.constant 0 : index
    %20 = vector.load %arg1[%c0_25, %c0_26] : memref<16x32xf32, #tpu.memory_space<vmem>>, vector<16x32xf32>
    %c0_27 = arith.constant 0 : index
    %c0_28 = arith.constant 0 : index
    %21 = vector.load %arg2[%c0_27, %c0_28] : memref<20x32xf32, #tpu.memory_space<vmem>>, vector<20x32xf32>
    %22 = tpu.iota {dimensions = array<i32: 0>} : vector<16x16xi32>
    %23 = tpu.iota {dimensions = array<i32: 1>} : vector<16x16xi32>
    %c1_i32 = arith.constant 1 : i32
    %24 = vector.broadcast %c1_i32 : i32 to vector<16x16xi32>
    %25 = arith.andi %22, %24 : vector<16x16xi32>
    %c1_i32_29 = arith.constant 1 : i32
    %26 = vector.broadcast %c1_i32_29 : i32 to vector<16x16xi32>
    %27 = arith.andi %23, %26 : vector<16x16xi32>
    %28 = arith.cmpi eq, %25, %27 : vector<16x16xi32>
    %cst = arith.constant 0.000000e+00 : f32
    %cst_30 = arith.constant -1.000000e+30 : f32
    %29 = vector.broadcast %cst : f32 to vector<16x16xf32>
    %30 = vector.broadcast %cst_30 : f32 to vector<16x16xf32>
    %31 = arith.select %28, %29, %30 : vector<16x16xi1>, vector<16x16xf32>
    %32 = tpu.iota {dimensions = array<i32: 0>} : vector<16x20xi32>
    %33 = tpu.iota {dimensions = array<i32: 1>} : vector<16x20xi32>
    %c1_i32_31 = arith.constant 1 : i32
    %34 = vector.broadcast %c1_i32_31 : i32 to vector<16x20xi32>
    %35 = arith.andi %32, %34 : vector<16x20xi32>
    %c1_i32_32 = arith.constant 1 : i32
    %36 = vector.broadcast %c1_i32_32 : i32 to vector<16x20xi32>
    %37 = arith.andi %33, %36 : vector<16x20xi32>
    %38 = arith.cmpi eq, %35, %37 : vector<16x20xi32>
    %cst_33 = arith.constant 0.000000e+00 : f32
    %cst_34 = arith.constant -1.000000e+30 : f32
    %39 = vector.broadcast %cst_33 : f32 to vector<16x20xf32>
    %40 = vector.broadcast %cst_34 : f32 to vector<16x20xf32>
    %41 = arith.select %38, %39, %40 : vector<16x20xi1>, vector<16x20xf32>
    %cst_35 = arith.constant dense<0.000000e+00> : vector<16x96xf32>
    %42 = tpu.matmul %20, %0, %cst_35 {dimension_numbers = #tpu.dot_dimension_numbers<[1], [0], [0], [1], [0, 0, 1, 1], [], []>} : vector<16x32xf32>, vector<32x96xf32>, vector<16x96xf32> -> vector<16x96xf32>
    %43 = vector.broadcast %1 : vector<1x96xf32> to vector<16x96xf32>
    %44 = arith.addf %42, %43 : vector<16x96xf32>
    %45 = vector.extract_strided_slice %44 {offsets = [0, 0], sizes = [16, 32], strides = [1, 1]} : vector<16x96xf32> to vector<16x32xf32>
    %46 = vector.extract_strided_slice %44 {offsets = [0, 32], sizes = [16, 32], strides = [1, 1]} : vector<16x96xf32> to vector<16x32xf32>
    %47 = vector.extract_strided_slice %44 {offsets = [0, 64], sizes = [16, 32], strides = [1, 1]} : vector<16x96xf32> to vector<16x32xf32>
    %48 = vector.extract_strided_slice %45 {offsets = [0, 0], sizes = [16, 8], strides = [1, 1]} : vector<16x32xf32> to vector<16x8xf32>
    %49 = vector.extract_strided_slice %46 {offsets = [0, 0], sizes = [16, 8], strides = [1, 1]} : vector<16x32xf32> to vector<16x8xf32>
    %50 = vector.extract_strided_slice %47 {offsets = [0, 0], sizes = [16, 8], strides = [1, 1]} : vector<16x32xf32> to vector<16x8xf32>
    %cst_36 = arith.constant dense<0.000000e+00> : vector<16x16xf32>
    %51 = tpu.matmul %48, %49, %cst_36 {dimension_numbers = #tpu.dot_dimension_numbers<[1], [1], [0], [0], [0, 0, 1, 0], [], []>} : vector<16x8xf32>, vector<16x8xf32>, vector<16x16xf32> -> vector<16x16xf32>
    %cst_37 = arith.constant 0.353553385 : f32
    %52 = vector.broadcast %cst_37 : f32 to vector<16x16xf32>
    %53 = arith.mulf %51, %52 : vector<16x16xf32>
    %54 = arith.addf %53, %31 : vector<16x16xf32>
    %cst_38 = arith.constant dense<0xFF800000> : vector<16xf32>
    %55 = vector.multi_reduction <maximumf>, %54, %cst_38 [1] : vector<16x16xf32> to vector<16xf32>
    %56 = vector.shape_cast %55 : vector<16xf32> to vector<16x1xf32>
    %57 = vector.broadcast %56 : vector<16x1xf32> to vector<16x16xf32>
    %58 = arith.subf %54, %57 : vector<16x16xf32>
    %59 = math.exp %58 : vector<16x16xf32>
    %cst_39 = arith.constant dense<0.000000e+00> : vector<16xf32>
    %60 = vector.multi_reduction <add>, %59, %cst_39 [1] : vector<16x16xf32> to vector<16xf32>
    %61 = vector.shape_cast %60 : vector<16xf32> to vector<16x1xf32>
    %62 = vector.broadcast %61 : vector<16x1xf32> to vector<16x16xf32>
    %63 = arith.divf %59, %62 : vector<16x16xf32>
    %cst_40 = arith.constant dense<0.000000e+00> : vector<16x8xf32>
    %64 = tpu.matmul %63, %50, %cst_40 {dimension_numbers = #tpu.dot_dimension_numbers<[1], [0], [0], [1], [0, 0, 1, 1], [], []>} : vector<16x16xf32>, vector<16x8xf32>, vector<16x8xf32> -> vector<16x8xf32>
    %65 = vector.extract_strided_slice %45 {offsets = [0, 8], sizes = [16, 8], strides = [1, 1]} : vector<16x32xf32> to vector<16x8xf32>
    %66 = vector.extract_strided_slice %46 {offsets = [0, 8], sizes = [16, 8], strides = [1, 1]} : vector<16x32xf32> to vector<16x8xf32>
    %67 = vector.extract_strided_slice %47 {offsets = [0, 8], sizes = [16, 8], strides = [1, 1]} : vector<16x32xf32> to vector<16x8xf32>
    %cst_41 = arith.constant dense<0.000000e+00> : vector<16x16xf32>
    %68 = tpu.matmul %65, %66, %cst_41 {dimension_numbers = #tpu.dot_dimension_numbers<[1], [1], [0], [0], [0, 0, 1, 0], [], []>} : vector<16x8xf32>, vector<16x8xf32>, vector<16x16xf32> -> vector<16x16xf32>
    %cst_42 = arith.constant 0.353553385 : f32
    %69 = vector.broadcast %cst_42 : f32 to vector<16x16xf32>
    %70 = arith.mulf %68, %69 : vector<16x16xf32>
    %71 = arith.addf %70, %31 : vector<16x16xf32>
    %cst_43 = arith.constant dense<0xFF800000> : vector<16xf32>
    %72 = vector.multi_reduction <maximumf>, %71, %cst_43 [1] : vector<16x16xf32> to vector<16xf32>
    %73 = vector.shape_cast %72 : vector<16xf32> to vector<16x1xf32>
    %74 = vector.broadcast %73 : vector<16x1xf32> to vector<16x16xf32>
    %75 = arith.subf %71, %74 : vector<16x16xf32>
    %76 = math.exp %75 : vector<16x16xf32>
    %cst_44 = arith.constant dense<0.000000e+00> : vector<16xf32>
    %77 = vector.multi_reduction <add>, %76, %cst_44 [1] : vector<16x16xf32> to vector<16xf32>
    %78 = vector.shape_cast %77 : vector<16xf32> to vector<16x1xf32>
    %79 = vector.broadcast %78 : vector<16x1xf32> to vector<16x16xf32>
    %80 = arith.divf %76, %79 : vector<16x16xf32>
    %cst_45 = arith.constant dense<0.000000e+00> : vector<16x8xf32>
    %81 = tpu.matmul %80, %67, %cst_45 {dimension_numbers = #tpu.dot_dimension_numbers<[1], [0], [0], [1], [0, 0, 1, 1], [], []>} : vector<16x16xf32>, vector<16x8xf32>, vector<16x8xf32> -> vector<16x8xf32>
    %82 = vector.extract_strided_slice %45 {offsets = [0, 16], sizes = [16, 8], strides = [1, 1]} : vector<16x32xf32> to vector<16x8xf32>
    %83 = vector.extract_strided_slice %46 {offsets = [0, 16], sizes = [16, 8], strides = [1, 1]} : vector<16x32xf32> to vector<16x8xf32>
    %84 = vector.extract_strided_slice %47 {offsets = [0, 16], sizes = [16, 8], strides = [1, 1]} : vector<16x32xf32> to vector<16x8xf32>
    %cst_46 = arith.constant dense<0.000000e+00> : vector<16x16xf32>
    %85 = tpu.matmul %82, %83, %cst_46 {dimension_numbers = #tpu.dot_dimension_numbers<[1], [1], [0], [0], [0, 0, 1, 0], [], []>} : vector<16x8xf32>, vector<16x8xf32>, vector<16x16xf32> -> vector<16x16xf32>
    %cst_47 = arith.constant 0.353553385 : f32
    %86 = vector.broadcast %cst_47 : f32 to vector<16x16xf32>
    %87 = arith.mulf %85, %86 : vector<16x16xf32>
    %88 = arith.addf %87, %31 : vector<16x16xf32>
    %cst_48 = arith.constant dense<0xFF800000> : vector<16xf32>
    %89 = vector.multi_reduction <maximumf>, %88, %cst_48 [1] : vector<16x16xf32> to vector<16xf32>
    %90 = vector.shape_cast %89 : vector<16xf32> to vector<16x1xf32>
    %91 = vector.broadcast %90 : vector<16x1xf32> to vector<16x16xf32>
    %92 = arith.subf %88, %91 : vector<16x16xf32>
    %93 = math.exp %92 : vector<16x16xf32>
    %cst_49 = arith.constant dense<0.000000e+00> : vector<16xf32>
    %94 = vector.multi_reduction <add>, %93, %cst_49 [1] : vector<16x16xf32> to vector<16xf32>
    %95 = vector.shape_cast %94 : vector<16xf32> to vector<16x1xf32>
    %96 = vector.broadcast %95 : vector<16x1xf32> to vector<16x16xf32>
    %97 = arith.divf %93, %96 : vector<16x16xf32>
    %cst_50 = arith.constant dense<0.000000e+00> : vector<16x8xf32>
    %98 = tpu.matmul %97, %84, %cst_50 {dimension_numbers = #tpu.dot_dimension_numbers<[1], [0], [0], [1], [0, 0, 1, 1], [], []>} : vector<16x16xf32>, vector<16x8xf32>, vector<16x8xf32> -> vector<16x8xf32>
    %99 = vector.extract_strided_slice %45 {offsets = [0, 24], sizes = [16, 8], strides = [1, 1]} : vector<16x32xf32> to vector<16x8xf32>
    %100 = vector.extract_strided_slice %46 {offsets = [0, 24], sizes = [16, 8], strides = [1, 1]} : vector<16x32xf32> to vector<16x8xf32>
    %101 = vector.extract_strided_slice %47 {offsets = [0, 24], sizes = [16, 8], strides = [1, 1]} : vector<16x32xf32> to vector<16x8xf32>
    %cst_51 = arith.constant dense<0.000000e+00> : vector<16x16xf32>
    %102 = tpu.matmul %99, %100, %cst_51 {dimension_numbers = #tpu.dot_dimension_numbers<[1], [1], [0], [0], [0, 0, 1, 0], [], []>} : vector<16x8xf32>, vector<16x8xf32>, vector<16x16xf32> -> vector<16x16xf32>
    %cst_52 = arith.constant 0.353553385 : f32
    %103 = vector.broadcast %cst_52 : f32 to vector<16x16xf32>
    %104 = arith.mulf %102, %103 : vector<16x16xf32>
    %105 = arith.addf %104, %31 : vector<16x16xf32>
    %cst_53 = arith.constant dense<0xFF800000> : vector<16xf32>
    %106 = vector.multi_reduction <maximumf>, %105, %cst_53 [1] : vector<16x16xf32> to vector<16xf32>
    %107 = vector.shape_cast %106 : vector<16xf32> to vector<16x1xf32>
    %108 = vector.broadcast %107 : vector<16x1xf32> to vector<16x16xf32>
    %109 = arith.subf %105, %108 : vector<16x16xf32>
    %110 = math.exp %109 : vector<16x16xf32>
    %cst_54 = arith.constant dense<0.000000e+00> : vector<16xf32>
    %111 = vector.multi_reduction <add>, %110, %cst_54 [1] : vector<16x16xf32> to vector<16xf32>
    %112 = vector.shape_cast %111 : vector<16xf32> to vector<16x1xf32>
    %113 = vector.broadcast %112 : vector<16x1xf32> to vector<16x16xf32>
    %114 = arith.divf %110, %113 : vector<16x16xf32>
    %cst_55 = arith.constant dense<0.000000e+00> : vector<16x8xf32>
    %115 = tpu.matmul %114, %101, %cst_55 {dimension_numbers = #tpu.dot_dimension_numbers<[1], [0], [0], [1], [0, 0, 1, 1], [], []>} : vector<16x16xf32>, vector<16x8xf32>, vector<16x8xf32> -> vector<16x8xf32>
    %116 = tpu.concatenate %64, %81, %98, %115 in 1 : vector<16x8xf32>, vector<16x8xf32>, vector<16x8xf32>, vector<16x8xf32> -> vector<16x32xf32>
    %cst_56 = arith.constant dense<0.000000e+00> : vector<16x32xf32>
    %117 = tpu.matmul %116, %7, %cst_56 {dimension_numbers = #tpu.dot_dimension_numbers<[1], [0], [0], [1], [0, 0, 1, 1], [], []>} : vector<16x32xf32>, vector<32x32xf32>, vector<16x32xf32> -> vector<16x32xf32>
    %118 = vector.broadcast %11 : vector<1x32xf32> to vector<16x32xf32>
    %119 = arith.addf %117, %118 : vector<16x32xf32>
    %120 = arith.addf %20, %119 : vector<16x32xf32>
    %cst_57 = arith.constant dense<0.000000e+00> : vector<16xf32>
    %121 = vector.multi_reduction <add>, %120, %cst_57 [1] : vector<16x32xf32> to vector<16xf32>
    %122 = vector.shape_cast %121 : vector<16xf32> to vector<16x1xf32>
    %cst_58 = arith.constant 3.200000e+01 : f32
    %123 = vector.broadcast %cst_58 : f32 to vector<16x1xf32>
    %124 = arith.divf %122, %123 : vector<16x1xf32>
    %125 = vector.broadcast %124 : vector<16x1xf32> to vector<16x32xf32>
    %126 = arith.subf %120, %125 : vector<16x32xf32>
    %127 = arith.mulf %126, %126 : vector<16x32xf32>
    %cst_59 = arith.constant dense<0.000000e+00> : vector<16xf32>
    %128 = vector.multi_reduction <add>, %127, %cst_59 [1] : vector<16x32xf32> to vector<16xf32>
    %129 = vector.shape_cast %128 : vector<16xf32> to vector<16x1xf32>
    %cst_60 = arith.constant 3.200000e+01 : f32
    %130 = vector.broadcast %cst_60 : f32 to vector<16x1xf32>
    %131 = arith.divf %129, %130 : vector<16x1xf32>
    %132 = vector.broadcast %124 : vector<16x1xf32> to vector<16x32xf32>
    %133 = arith.subf %120, %132 : vector<16x32xf32>
    %cst_61 = arith.constant 9.99999974E-6 : f32
    %134 = vector.broadcast %cst_61 : f32 to vector<16x1xf32>
    %135 = arith.addf %131, %134 : vector<16x1xf32>
    %136 = math.rsqrt %135 : vector<16x1xf32>
    %137 = vector.broadcast %136 : vector<16x1xf32> to vector<16x32xf32>
    %138 = arith.mulf %133, %137 : vector<16x32xf32>
    %139 = vector.broadcast %14 : vector<1x32xf32> to vector<16x32xf32>
    %140 = arith.mulf %138, %139 : vector<16x32xf32>
    %141 = vector.broadcast %15 : vector<1x32xf32> to vector<16x32xf32>
    %142 = arith.addf %140, %141 : vector<16x32xf32>
    %cst_62 = arith.constant dense<0.000000e+00> : vector<16x32xf32>
    %143 = tpu.matmul %142, %6, %cst_62 {dimension_numbers = #tpu.dot_dimension_numbers<[1], [0], [0], [1], [0, 0, 1, 1], [], []>} : vector<16x32xf32>, vector<32x32xf32>, vector<16x32xf32> -> vector<16x32xf32>
    %144 = vector.broadcast %10 : vector<1x32xf32> to vector<16x32xf32>
    %145 = arith.addf %143, %144 : vector<16x32xf32>
    %cst_63 = arith.constant dense<0.000000e+00> : vector<20x64xf32>
    %146 = tpu.matmul %21, %2, %cst_63 {dimension_numbers = #tpu.dot_dimension_numbers<[1], [0], [0], [1], [0, 0, 1, 1], [], []>} : vector<20x32xf32>, vector<32x64xf32>, vector<20x64xf32> -> vector<20x64xf32>
    %147 = vector.broadcast %4 : vector<1x64xf32> to vector<20x64xf32>
    %148 = arith.addf %146, %147 : vector<20x64xf32>
    %149 = vector.extract_strided_slice %148 {offsets = [0, 0], sizes = [20, 32], strides = [1, 1]} : vector<20x64xf32> to vector<20x32xf32>
    %150 = vector.extract_strided_slice %148 {offsets = [0, 32], sizes = [20, 32], strides = [1, 1]} : vector<20x64xf32> to vector<20x32xf32>
    %151 = vector.extract_strided_slice %145 {offsets = [0, 0], sizes = [16, 8], strides = [1, 1]} : vector<16x32xf32> to vector<16x8xf32>
    %152 = vector.extract_strided_slice %149 {offsets = [0, 0], sizes = [20, 8], strides = [1, 1]} : vector<20x32xf32> to vector<20x8xf32>
    %153 = vector.extract_strided_slice %150 {offsets = [0, 0], sizes = [20, 8], strides = [1, 1]} : vector<20x32xf32> to vector<20x8xf32>
    %cst_64 = arith.constant dense<0.000000e+00> : vector<16x20xf32>
    %154 = tpu.matmul %151, %152, %cst_64 {dimension_numbers = #tpu.dot_dimension_numbers<[1], [1], [0], [0], [0, 0, 1, 0], [], []>} : vector<16x8xf32>, vector<20x8xf32>, vector<16x20xf32> -> vector<16x20xf32>
    %cst_65 = arith.constant 0.353553385 : f32
    %155 = vector.broadcast %cst_65 : f32 to vector<16x20xf32>
    %156 = arith.mulf %154, %155 : vector<16x20xf32>
    %157 = arith.addf %156, %41 : vector<16x20xf32>
    %cst_66 = arith.constant dense<0xFF800000> : vector<16xf32>
    %158 = vector.multi_reduction <maximumf>, %157, %cst_66 [1] : vector<16x20xf32> to vector<16xf32>
    %159 = vector.shape_cast %158 : vector<16xf32> to vector<16x1xf32>
    %160 = vector.broadcast %159 : vector<16x1xf32> to vector<16x20xf32>
    %161 = arith.subf %157, %160 : vector<16x20xf32>
    %162 = math.exp %161 : vector<16x20xf32>
    %cst_67 = arith.constant dense<0.000000e+00> : vector<16xf32>
    %163 = vector.multi_reduction <add>, %162, %cst_67 [1] : vector<16x20xf32> to vector<16xf32>
    %164 = vector.shape_cast %163 : vector<16xf32> to vector<16x1xf32>
    %165 = vector.broadcast %164 : vector<16x1xf32> to vector<16x20xf32>
    %166 = arith.divf %162, %165 : vector<16x20xf32>
    %cst_68 = arith.constant dense<0.000000e+00> : vector<16x8xf32>
    %167 = tpu.matmul %166, %153, %cst_68 {dimension_numbers = #tpu.dot_dimension_numbers<[1], [0], [0], [1], [0, 0, 1, 1], [], []>} : vector<16x20xf32>, vector<20x8xf32>, vector<16x8xf32> -> vector<16x8xf32>
    %168 = vector.extract_strided_slice %145 {offsets = [0, 8], sizes = [16, 8], strides = [1, 1]} : vector<16x32xf32> to vector<16x8xf32>
    %169 = vector.extract_strided_slice %149 {offsets = [0, 8], sizes = [20, 8], strides = [1, 1]} : vector<20x32xf32> to vector<20x8xf32>
    %170 = vector.extract_strided_slice %150 {offsets = [0, 8], sizes = [20, 8], strides = [1, 1]} : vector<20x32xf32> to vector<20x8xf32>
    %cst_69 = arith.constant dense<0.000000e+00> : vector<16x20xf32>
    %171 = tpu.matmul %168, %169, %cst_69 {dimension_numbers = #tpu.dot_dimension_numbers<[1], [1], [0], [0], [0, 0, 1, 0], [], []>} : vector<16x8xf32>, vector<20x8xf32>, vector<16x20xf32> -> vector<16x20xf32>
    %cst_70 = arith.constant 0.353553385 : f32
    %172 = vector.broadcast %cst_70 : f32 to vector<16x20xf32>
    %173 = arith.mulf %171, %172 : vector<16x20xf32>
    %174 = arith.addf %173, %41 : vector<16x20xf32>
    %cst_71 = arith.constant dense<0xFF800000> : vector<16xf32>
    %175 = vector.multi_reduction <maximumf>, %174, %cst_71 [1] : vector<16x20xf32> to vector<16xf32>
    %176 = vector.shape_cast %175 : vector<16xf32> to vector<16x1xf32>
    %177 = vector.broadcast %176 : vector<16x1xf32> to vector<16x20xf32>
    %178 = arith.subf %174, %177 : vector<16x20xf32>
    %179 = math.exp %178 : vector<16x20xf32>
    %cst_72 = arith.constant dense<0.000000e+00> : vector<16xf32>
    %180 = vector.multi_reduction <add>, %179, %cst_72 [1] : vector<16x20xf32> to vector<16xf32>
    %181 = vector.shape_cast %180 : vector<16xf32> to vector<16x1xf32>
    %182 = vector.broadcast %181 : vector<16x1xf32> to vector<16x20xf32>
    %183 = arith.divf %179, %182 : vector<16x20xf32>
    %cst_73 = arith.constant dense<0.000000e+00> : vector<16x8xf32>
    %184 = tpu.matmul %183, %170, %cst_73 {dimension_numbers = #tpu.dot_dimension_numbers<[1], [0], [0], [1], [0, 0, 1, 1], [], []>} : vector<16x20xf32>, vector<20x8xf32>, vector<16x8xf32> -> vector<16x8xf32>
    %185 = vector.extract_strided_slice %145 {offsets = [0, 16], sizes = [16, 8], strides = [1, 1]} : vector<16x32xf32> to vector<16x8xf32>
    %186 = vector.extract_strided_slice %149 {offsets = [0, 16], sizes = [20, 8], strides = [1, 1]} : vector<20x32xf32> to vector<20x8xf32>
    %187 = vector.extract_strided_slice %150 {offsets = [0, 16], sizes = [20, 8], strides = [1, 1]} : vector<20x32xf32> to vector<20x8xf32>
    %cst_74 = arith.constant dense<0.000000e+00> : vector<16x20xf32>
    %188 = tpu.matmul %185, %186, %cst_74 {dimension_numbers = #tpu.dot_dimension_numbers<[1], [1], [0], [0], [0, 0, 1, 0], [], []>} : vector<16x8xf32>, vector<20x8xf32>, vector<16x20xf32> -> vector<16x20xf32>
    %cst_75 = arith.constant 0.353553385 : f32
    %189 = vector.broadcast %cst_75 : f32 to vector<16x20xf32>
    %190 = arith.mulf %188, %189 : vector<16x20xf32>
    %191 = arith.addf %190, %41 : vector<16x20xf32>
    %cst_76 = arith.constant dense<0xFF800000> : vector<16xf32>
    %192 = vector.multi_reduction <maximumf>, %191, %cst_76 [1] : vector<16x20xf32> to vector<16xf32>
    %193 = vector.shape_cast %192 : vector<16xf32> to vector<16x1xf32>
    %194 = vector.broadcast %193 : vector<16x1xf32> to vector<16x20xf32>
    %195 = arith.subf %191, %194 : vector<16x20xf32>
    %196 = math.exp %195 : vector<16x20xf32>
    %cst_77 = arith.constant dense<0.000000e+00> : vector<16xf32>
    %197 = vector.multi_reduction <add>, %196, %cst_77 [1] : vector<16x20xf32> to vector<16xf32>
    %198 = vector.shape_cast %197 : vector<16xf32> to vector<16x1xf32>
    %199 = vector.broadcast %198 : vector<16x1xf32> to vector<16x20xf32>
    %200 = arith.divf %196, %199 : vector<16x20xf32>
    %cst_78 = arith.constant dense<0.000000e+00> : vector<16x8xf32>
    %201 = tpu.matmul %200, %187, %cst_78 {dimension_numbers = #tpu.dot_dimension_numbers<[1], [0], [0], [1], [0, 0, 1, 1], [], []>} : vector<16x20xf32>, vector<20x8xf32>, vector<16x8xf32> -> vector<16x8xf32>
    %202 = vector.extract_strided_slice %145 {offsets = [0, 24], sizes = [16, 8], strides = [1, 1]} : vector<16x32xf32> to vector<16x8xf32>
    %203 = vector.extract_strided_slice %149 {offsets = [0, 24], sizes = [20, 8], strides = [1, 1]} : vector<20x32xf32> to vector<20x8xf32>
    %204 = vector.extract_strided_slice %150 {offsets = [0, 24], sizes = [20, 8], strides = [1, 1]} : vector<20x32xf32> to vector<20x8xf32>
    %cst_79 = arith.constant dense<0.000000e+00> : vector<16x20xf32>
    %205 = tpu.matmul %202, %203, %cst_79 {dimension_numbers = #tpu.dot_dimension_numbers<[1], [1], [0], [0], [0, 0, 1, 0], [], []>} : vector<16x8xf32>, vector<20x8xf32>, vector<16x20xf32> -> vector<16x20xf32>
    %cst_80 = arith.constant 0.353553385 : f32
    %206 = vector.broadcast %cst_80 : f32 to vector<16x20xf32>
    %207 = arith.mulf %205, %206 : vector<16x20xf32>
    %208 = arith.addf %207, %41 : vector<16x20xf32>
    %cst_81 = arith.constant dense<0xFF800000> : vector<16xf32>
    %209 = vector.multi_reduction <maximumf>, %208, %cst_81 [1] : vector<16x20xf32> to vector<16xf32>
    %210 = vector.shape_cast %209 : vector<16xf32> to vector<16x1xf32>
    %211 = vector.broadcast %210 : vector<16x1xf32> to vector<16x20xf32>
    %212 = arith.subf %208, %211 : vector<16x20xf32>
    %213 = math.exp %212 : vector<16x20xf32>
    %cst_82 = arith.constant dense<0.000000e+00> : vector<16xf32>
    %214 = vector.multi_reduction <add>, %213, %cst_82 [1] : vector<16x20xf32> to vector<16xf32>
    %215 = vector.shape_cast %214 : vector<16xf32> to vector<16x1xf32>
    %216 = vector.broadcast %215 : vector<16x1xf32> to vector<16x20xf32>
    %217 = arith.divf %213, %216 : vector<16x20xf32>
    %cst_83 = arith.constant dense<0.000000e+00> : vector<16x8xf32>
    %218 = tpu.matmul %217, %204, %cst_83 {dimension_numbers = #tpu.dot_dimension_numbers<[1], [0], [0], [1], [0, 0, 1, 1], [], []>} : vector<16x20xf32>, vector<20x8xf32>, vector<16x8xf32> -> vector<16x8xf32>
    %219 = tpu.concatenate %167, %184, %201, %218 in 1 : vector<16x8xf32>, vector<16x8xf32>, vector<16x8xf32>, vector<16x8xf32> -> vector<16x32xf32>
    %cst_84 = arith.constant dense<0.000000e+00> : vector<16x32xf32>
    %220 = tpu.matmul %219, %8, %cst_84 {dimension_numbers = #tpu.dot_dimension_numbers<[1], [0], [0], [1], [0, 0, 1, 1], [], []>} : vector<16x32xf32>, vector<32x32xf32>, vector<16x32xf32> -> vector<16x32xf32>
    %221 = vector.broadcast %12 : vector<1x32xf32> to vector<16x32xf32>
    %222 = arith.addf %220, %221 : vector<16x32xf32>
    %223 = arith.addf %142, %222 : vector<16x32xf32>
    %cst_85 = arith.constant dense<0.000000e+00> : vector<16xf32>
    %224 = vector.multi_reduction <add>, %223, %cst_85 [1] : vector<16x32xf32> to vector<16xf32>
    %225 = vector.shape_cast %224 : vector<16xf32> to vector<16x1xf32>
    %cst_86 = arith.constant 3.200000e+01 : f32
    %226 = vector.broadcast %cst_86 : f32 to vector<16x1xf32>
    %227 = arith.divf %225, %226 : vector<16x1xf32>
    %228 = vector.broadcast %227 : vector<16x1xf32> to vector<16x32xf32>
    %229 = arith.subf %223, %228 : vector<16x32xf32>
    %230 = arith.mulf %229, %229 : vector<16x32xf32>
    %cst_87 = arith.constant dense<0.000000e+00> : vector<16xf32>
    %231 = vector.multi_reduction <add>, %230, %cst_87 [1] : vector<16x32xf32> to vector<16xf32>
    %232 = vector.shape_cast %231 : vector<16xf32> to vector<16x1xf32>
    %cst_88 = arith.constant 3.200000e+01 : f32
    %233 = vector.broadcast %cst_88 : f32 to vector<16x1xf32>
    %234 = arith.divf %232, %233 : vector<16x1xf32>
    %235 = vector.broadcast %227 : vector<16x1xf32> to vector<16x32xf32>
    %236 = arith.subf %223, %235 : vector<16x32xf32>
    %cst_89 = arith.constant 9.99999974E-6 : f32
    %237 = vector.broadcast %cst_89 : f32 to vector<16x1xf32>
    %238 = arith.addf %234, %237 : vector<16x1xf32>
    %239 = math.rsqrt %238 : vector<16x1xf32>
    %240 = vector.broadcast %239 : vector<16x1xf32> to vector<16x32xf32>
    %241 = arith.mulf %236, %240 : vector<16x32xf32>
    %242 = vector.broadcast %16 : vector<1x32xf32> to vector<16x32xf32>
    %243 = arith.mulf %241, %242 : vector<16x32xf32>
    %244 = vector.broadcast %17 : vector<1x32xf32> to vector<16x32xf32>
    %245 = arith.addf %243, %244 : vector<16x32xf32>
    %cst_90 = arith.constant dense<0.000000e+00> : vector<16x64xf32>
    %246 = tpu.matmul %245, %3, %cst_90 {dimension_numbers = #tpu.dot_dimension_numbers<[1], [0], [0], [1], [0, 0, 1, 1], [], []>} : vector<16x32xf32>, vector<32x64xf32>, vector<16x64xf32> -> vector<16x64xf32>
    %247 = vector.broadcast %5 : vector<1x64xf32> to vector<16x64xf32>
    %248 = arith.addf %246, %247 : vector<16x64xf32>
    %cst_91 = arith.constant 0.000000e+00 : f32
    %249 = vector.broadcast %cst_91 : f32 to vector<16x64xf32>
    %250 = arith.maximumf %248, %249 : vector<16x64xf32>
    %cst_92 = arith.constant dense<0.000000e+00> : vector<16x32xf32>
    %251 = tpu.matmul %250, %9, %cst_92 {dimension_numbers = #tpu.dot_dimension_numbers<[1], [0], [0], [1], [0, 0, 1, 1], [], []>} : vector<16x64xf32>, vector<64x32xf32>, vector<16x32xf32> -> vector<16x32xf32>
    %252 = vector.broadcast %13 : vector<1x32xf32> to vector<16x32xf32>
    %253 = arith.addf %251, %252 : vector<16x32xf32>
    %254 = arith.addf %245, %253 : vector<16x32xf32>
    %cst_93 = arith.constant dense<0.000000e+00> : vector<16xf32>
    %255 = vector.multi_reduction <add>, %254, %cst_93 [1] : vector<16x32xf32> to vector<16xf32>
    %256 = vector.shape_cast %255 : vector<16xf32> to vector<16x1xf32>
    %cst_94 = arith.constant 3.200000e+01 : f32
    %257 = vector.broadcast %cst_94 : f32 to vector<16x1xf32>
    %258 = arith.divf %256, %257 : vector<16x1xf32>
    %259 = vector.broadcast %258 : vector<16x1xf32> to vector<16x32xf32>
    %260 = arith.subf %254, %259 : vector<16x32xf32>
    %261 = arith.mulf %260, %260 : vector<16x32xf32>
    %cst_95 = arith.constant dense<0.000000e+00> : vector<16xf32>
    %262 = vector.multi_reduction <add>, %261, %cst_95 [1] : vector<16x32xf32> to vector<16xf32>
    %263 = vector.shape_cast %262 : vector<16xf32> to vector<16x1xf32>
    %cst_96 = arith.constant 3.200000e+01 : f32
    %264 = vector.broadcast %cst_96 : f32 to vector<16x1xf32>
    %265 = arith.divf %263, %264 : vector<16x1xf32>
    %266 = vector.broadcast %258 : vector<16x1xf32> to vector<16x32xf32>
    %267 = arith.subf %254, %266 : vector<16x32xf32>
    %cst_97 = arith.constant 9.99999974E-6 : f32
    %268 = vector.broadcast %cst_97 : f32 to vector<16x1xf32>
    %269 = arith.addf %265, %268 : vector<16x1xf32>
    %270 = math.rsqrt %269 : vector<16x1xf32>
    %271 = vector.broadcast %270 : vector<16x1xf32> to vector<16x32xf32>
    %272 = arith.mulf %267, %271 : vector<16x32xf32>
    %273 = vector.broadcast %18 : vector<1x32xf32> to vector<16x32xf32>
    %274 = arith.mulf %272, %273 : vector<16x32xf32>
    %275 = vector.broadcast %19 : vector<1x32xf32> to vector<16x32xf32>
    %276 = arith.addf %274, %275 : vector<16x32xf32>
    %c0_98 = arith.constant 0 : index
    %c0_99 = arith.constant 0 : index
    %277 = vector.load %arg6[%c0_98, %c0_99] : memref<16x32xf32, #tpu.memory_space<vmem>>, vector<16x32xf32>
    tpu.vector_store %arg6[%c0_98, %c0_99], %276 {strides = array<i32>} : memref<16x32xf32, #tpu.memory_space<vmem>>, vector<16x32xf32>,
    return
  }
  func.func @transform_0(%arg0: i32) -> (i32, i32) {
    %c0_i32 = arith.constant 0 : i32
    %c0_i32_0 = arith.constant 0 : i32
    %c0_i32_1 = arith.constant 0 : i32
    return %c0_i32, %c0_i32_0 : i32, i32
  }
  func.func @transform_1(%arg0: i32) -> (i32, i32) {
    %c0_i32 = arith.constant 0 : i32
    %c0_i32_0 = arith.constant 0 : i32
    %c0_i32_1 = arith.constant 0 : i32
    return %c0_i32, %c0_i32_0 : i32, i32
  }
  func.func @transform_2(%arg0: i32) -> (i32, i32) {
    %c0_i32 = arith.constant 0 : i32
    %c0_i32_0 = arith.constant 0 : i32
    %c0_i32_1 = arith.constant 0 : i32
    return %c0_i32, %c0_i32_0 : i32, i32
  }
  func.func @transform_3(%arg0: i32) -> (i32, i32) {
    %c0_i32 = arith.constant 0 : i32
    %c0_i32_0 = arith.constant 0 : i32
    %c0_i32_1 = arith.constant 0 : i32
    return %c0_i32, %c0_i32_0 : i32, i32
  }
  func.func @transform_4(%arg0: i32) -> (i32, i32) {
    %c0_i32 = arith.constant 0 : i32
    %c0_i32_0 = arith.constant 0 : i32
    %c0_i32_1 = arith.constant 0 : i32
    return %c0_i32, %c0_i32_0 : i32, i32
  }
  func.func @transform_5(%arg0: i32) -> (i32, i32) {
    %c0_i32 = arith.constant 0 : i32
    %c0_i32_0 = arith.constant 0 : i32
    %c0_i32_1 = arith.constant 0 : i32
    return %c0_i32, %c0_i32_0 : i32, i32
  }
}

</mosaic_0001>

<llo_original>
// kernel: transformer_decoder_layer.1
$region0: #{transformer_decoder_layer.1}
  #allocation0 [shape = 'u32[]', space=smem, size = 0x4, offset = 0x4, fixed_abs, tag = 'smem constant byte address 0x4 - core index']
  #allocation1 [shape = 'u32[72,128]{1,0:T(1,128)}', space=vmem, size = 0x9000, scoped, tag = 'internal scratch']
  %s0 = inlined_call_operand.vmem [shape: f32[16,32], index: 0, kind: input, shape index: {}]
  %s1 = inlined_call_operand.vmem [shape: f32[20,32], index: 1, kind: input, shape index: {}]
  %s2 = inlined_call_operand.vmem [shape: f32[33,96], index: 2, kind: input, shape index: {}]
  %s3 = inlined_call_operand.vmem [shape: f32[66,64], index: 3, kind: input, shape index: {}]
  %s4 = inlined_call_operand.vmem [shape: f32[170,32], index: 4, kind: input, shape index: {}]
  %s5 = inlined_call_operand.hbm [shape: f32[16,32], index: 5, kind: output, shape index: {}]
  %s6 = sld [smem:[#allocation0]]
  $region30: #{transformer_decoder_layer.1} parent=0
    _
  %s8 = ssub.s32 1, %s6
  %s9 = scalar_select 0, %s8, %s6
  $region1: #{transformer_decoder_layer.1} parent=0
    #allocation2 [shape = 'u8[8192]{0}', space=vmem, size = 0x2000, scoped, tag = 'output window, operand 0, single buffered']
    #allocation3 [shape = 's32[1]{0}', space=sflag, size = 0x4, scoped, tag = 'scoped memory for transformer_decoder_layer.1']
    %10 = vsyncpa [#allocation3], 0
    // Predicated region
    $region2: #{transformer_decoder_layer.1} parent=1 // pred_check
      _
    $region3: #{transformer_decoder_layer.1} parent=1 // pred_check_branch
      %12 = sbr.rel (0) target = $region5
    $region4: #{transformer_decoder_layer.1} parent=1 // pred_region
      _
    $region5: #{transformer_decoder_layer.1} parent=1 // pred_fallthru
      _
    // Predicated region
    $region6: #{transformer_decoder_layer.1} parent=1 // pred_check
      _
    $region7: #{transformer_decoder_layer.1} parent=1 // pred_check_branch
      %14 = sbr.rel (0) target = $region9
    $region8: #{transformer_decoder_layer.1} parent=1 // pred_region
      _
    $region9: #{transformer_decoder_layer.1} parent=1 // pred_fallthru
      _
    // Predicated region
    $region10: #{transformer_decoder_layer.1} parent=1 // pred_check
      _
    $region11: #{transformer_decoder_layer.1} parent=1 // pred_check_branch
      %16 = sbr.rel (0) target = $region13
    $region12: #{transformer_decoder_layer.1} parent=1 // pred_region
      _
    $region13: #{transformer_decoder_layer.1} parent=1 // pred_fallthru
      _
    // Predicated region
    $region14: #{transformer_decoder_layer.1} parent=1 // pred_check
      _
    $region15: #{transformer_decoder_layer.1} parent=1 // pred_check_branch
      %18 = sbr.rel (0) target = $region17
    $region16: #{transformer_decoder_layer.1} parent=1 // pred_region
      _
    $region17: #{transformer_decoder_layer.1} parent=1 // pred_fallthru
      _
    // Predicated region
    $region18: #{transformer_decoder_layer.1} parent=1 // pred_check
      _
    $region19: #{transformer_decoder_layer.1} parent=1 // pred_check_branch
      %20 = sbr.rel (0) target = $region21
    $region20: #{transformer_decoder_layer.1} parent=1 // pred_region
      _
    $region21: #{transformer_decoder_layer.1} parent=1 // pred_fallthru
      _
    %v21 = vld [vmem:[%s2] sm:$0xff]
    %v22 = vld [vmem:[%s2 + $0x8] sm:$0xff]
    %v23 = vld [vmem:[%s2 + $0x10] sm:$0xff]
    %v24 = vld [vmem:[%s2 + $0x18] sm:$0xff]
    %v25 = vld [vmem:[%s2 + $0x20] sm:$0x1]
    %v26 = vld [vmem:[%s3] sm:$0xff]
    %v27 = vld [vmem:[%s3 + $0x8] sm:$0xff]
    %v28 = vld [vmem:[%s3 + $0x10] sm:$0xff]
    %v29 = vld [vmem:[%s3 + $0x18] sm:$0xff]
    %v30 = vld [vmem:[%s3 + $0x20] sm:$0xff]
    %v31 = vld [vmem:[%s3 + $0x28] sm:$0xff]
    %v32 = vld [vmem:[%s3 + $0x30] sm:$0xff]
    %v33 = vld [vmem:[%s3 + $0x38] sm:$0xff]
    %v34 = vld [vmem:[%s3 + $0x40] sm:$0x1]
    %v35 = vld [vmem:[%s3 + $0x41] sm:$0x1]
    %v36 = vld [vmem:[%s4] sm:$0xff]
    %v37 = vld [vmem:[%s4 + $0x8] sm:$0xff]
    %v38 = vld [vmem:[%s4 + $0x10] sm:$0xff]
    %v39 = vld [vmem:[%s4 + $0x18] sm:$0xff]
    %v40 = vld [vmem:[%s4 + $0x20] sm:$0xff]
    %v41 = vld [vmem:[%s4 + $0x28] sm:$0xff]
    %v42 = vld [vmem:[%s4 + $0x30] sm:$0xff]
    %v43 = vld [vmem:[%s4 + $0x38] sm:$0xff]
    %v44 = vld [vmem:[%s4 + $0x40] sm:$0xff]
    %v45 = vld [vmem:[%s4 + $0x48] sm:$0xff]
    %v46 = vld [vmem:[%s4 + $0x50] sm:$0xff]
    %v47 = vld [vmem:[%s4 + $0x58] sm:$0xff]
    %v48 = vld [vmem:[%s4 + $0x60] sm:$0xff]
    %v49 = vld [vmem:[%s4 + $0x68] sm:$0xff]
    %v50 = vld [vmem:[%s4 + $0x70] sm:$0xff]
    %v51 = vld [vmem:[%s4 + $0x78] sm:$0xff]
    %v52 = vld [vmem:[%s4 + $0x80] sm:$0xff]
    %v53 = vld [vmem:[%s4 + $0x88] sm:$0xff]
    %v54 = vld [vmem:[%s4 + $0x90] sm:$0xff]
    %v55 = vld [vmem:[%s4 + $0x98] sm:$0xff]
    %v56 = vld [vmem:[%s4 + $0xa0] sm:$0x1]
    %v57 = vld [vmem:[%s4 + $0xa1] sm:$0x1]
    %v58 = vld [vmem:[%s4 + $0xa2] sm:$0x1]
    %v59 = vld [vmem:[%s4 + $0xa3] sm:$0x1]
    %v60 = vld [vmem:[%s4 + $0xa4] sm:$0x1]
    %v61 = vld [vmem:[%s4 + $0xa5] sm:$0x1]
    %v62 = vld [vmem:[%s4 + $0xa6] sm:$0x1]
    %v63 = vld [vmem:[%s4 + $0xa7] sm:$0x1]
    %v64 = vld [vmem:[%s4 + $0xa8] sm:$0x1]
    %v65 = vld [vmem:[%s4 + $0xa9] sm:$0x1]
    %v66 = vld [vmem:[%s0] sm:$0xff]
    %v67 = vld [vmem:[%s0 + $0x8] sm:$0xff]
    %v68 = vld [vmem:[%s1] sm:$0xff]
    %v69 = vld [vmem:[%s1 + $0x8] sm:$0xff]
    %v70 = vld [vmem:[%s1 + $0x10] sm:$0xf]
    %v71 = vlaneseq
    %v72 = vshrl.u32 %v71, 7
    %v73 = vadd.s32 %v72, 8
    %v74 = vlaneseq
    %v75 = vand.u32 %v74, 127
    %v76 = vand.u32 %v72, 1
    %v77 = vand.u32 %v73, 1
    %v78 = vand.u32 %v75, 1
    %vm79 = vcmp.eq.s32.totalorder %v76, %v78
    %vm80 = vcmp.eq.s32.totalorder %v77, %v78
    %v81 = vsel %vm79, 0.0, -1e+30
    %v82 = vsel %vm80, 0.0, -1e+30
    %v83 = vperm.slane %v25, 0
    %vm84 = vcmask 261120
    %v86 = vsel %vm84, %v66, 0
    %v89 = vsel %vm84, %v67, 0
    %91 = vmatpush.msra.mxu0 0.0
    %92 = vmatpush.msra.mxu0 0.0
    %93 = vmatpush.msra.mxu0 0.0
    %94 = vmatpush.msra.mxu0 0.0
    %95 = vmatpush.msra.mxu0 0.0
    %96 = vmatpush.msra.mxu0 0.0
    %97 = vmatpush.msra.mxu0 0.0
    %98 = vmatpush.msra.mxu0 0.0
    %99 = vmatpush.msra.mxu0 0.0
    %100 = vmatpush.msra.mxu0 0.0
    %101 = vmatpush.msra.mxu0 0.0
    %102 = vmatpush.msra.mxu0 0.0
    %103 = vmatpush.msra.mxu0 %v24
    %104 = vmatpush.msra.mxu0 %v23
    %105 = vmatpush.msra.mxu0 %v22
    %106 = vmatpush.msra.mxu0 %v21
    %107 = vmatmul.f32.gmra.mxu0 %v86
    %v108 = vpop.f32.mrf.mxu0
    %v109 = vadd.f32 %v83, %v108
    %110 = vmatmul.f32.gmra.mxu0 %v89
    %v111 = vpop.f32.mrf.mxu0
    %v112 = vadd.f32 %v83, %v111
    %113 = vdwg.mxu0
    %116 = vrot.lane.b32.xlu0 %v109, 96
    %v117 = vpop.permute.xlu0 %116
    %118 = vrot.lane.b32.xlu0 %v112, 96
    %v119 = vpop.permute.xlu0 %118
    %vm120 = vcmask 64512
    %v121 = vsel %vm120, %v109, 0
    %v123 = vsel %vm120, %v112, 0
    %v125 = vsel %vm120, %v117, 0
    %v127 = vsel %vm120, %v119, 0
    %129 = vmatpush.xpose.msra.mxu0 0.0
    %130 = vmatpush.xpose.msra.mxu0 0.0
    %131 = vmatpush.xpose.msra.mxu0 0.0
    %132 = vmatpush.xpose.msra.mxu0 0.0
    %133 = vmatpush.xpose.msra.mxu0 0.0
    %134 = vmatpush.xpose.msra.mxu0 0.0
    %135 = vmatpush.xpose.msra.mxu0 0.0
    %136 = vmatpush.xpose.msra.mxu0 0.0
    %137 = vmatpush.xpose.msra.mxu0 0.0
    %138 = vmatpush.xpose.msra.mxu0 0.0
    %139 = vmatpush.xpose.msra.mxu0 0.0
    %140 = vmatpush.xpose.msra.mxu0 0.0
    %141 = vmatpush.xpose.msra.mxu0 0.0
    %142 = vmatpush.xpose.msra.mxu0 0.0
    %143 = vmatpush.xpose.msra.mxu0 %v127
    %144 = vmatpush.xpose.msra.mxu0 %v125
    %145 = vmatmul.f32.gmra.mxu0 %v121
    %v146 = vpop.f32.mrf.mxu0
    %v147 = vadd.f32 0.0, %v146
    %148 = vmatmul.f32.gmra.mxu0 %v123
    %v149 = vpop.f32.mrf.mxu0
    %v150 = vadd.f32 0.0, %v149
    %151 = vdwg.mxu0
    %v152 = vmul.f32 %v147, 0.35355338
    %v153 = vmul.f32 %v150, 0.35355338
    %v154 = vadd.f32 %v152, %v81
    %v155 = vadd.f32 %v153, %v82
    %vm156 = vcmask 130048
    %v157 = vsel %vm156, %v154, -inf
    %158 = vmax.xlane.f32.xlu0 %v157
    %v159 = vpop.xlane.xlu0 %158
    %v160 = vsel %vm156, %v155, -inf
    %161 = vmax.xlane.f32.xlu0 %v160
    %v162 = vpop.xlane.xlu0 %161
    %v163 = vsub.f32 %v154, %v159
    %v164 = vsub.f32 %v155, %v162
    %v165 = vmul.f32 %v163, 1.442695
    %v166 = vpow.pop %v165
    %v167 = vmul.f32 %v164, 1.442695
    %v168 = vpow.pop %v167
    %v169 = vsel %vm156, %v166, 0.0
    %170 = vadd.xlane.f32.xlu0 %v169
    %v171 = vpop.xlane.xlu0 %170
    %v172 = vsel %vm156, %v168, 0.0
    %173 = vadd.xlane.f32.xlu0 %v172
    %v174 = vpop.xlane.xlu0 %173
    %v175 = vrcp.pop %v171
    %v176 = vmul.f32 %v171, %v175
    %v177 = vsub.f32 1.0, %v176
    %v178 = vmul.f32 %v175, %v177
    %v179 = vadd.f32 %v175, %v178
    %vm180 = vweird.f32 %v171
    %vm181 = vweird.f32 %v175
    %vm182 = vmor %vm180, %vm181
    %v183 = vsel %vm182, %v175, %v179
    %v184 = vand.u32 2147483647, %v171
    %vm185 = vcmp.eq.f32.partialorder %v184, 8.507059e+37
    %v186 = vand.u32 %v171, 2147483648
    %v187 = vor.u32 1.1754944e-38, %v186
    %v188 = vsel %vm185, %v187, %v183
    %v189 = vmul.f32 %v166, %v188
    %v190 = vrcp.pop %v174
    %v191 = vmul.f32 %v174, %v190
    %v192 = vsub.f32 1.0, %v191
    %v193 = vmul.f32 %v190, %v192
    %v194 = vadd.f32 %v190, %v193
    %vm195 = vweird.f32 %v174
    %vm196 = vweird.f32 %v190
    %vm197 = vmor %vm195, %vm196
    %v198 = vsel %vm197, %v190, %v194
    %v199 = vand.u32 2147483647, %v174
    %vm200 = vcmp.eq.f32.partialorder %v199, 8.507059e+37
    %v201 = vand.u32 %v174, 2147483648
    %v202 = vor.u32 1.1754944e-38, %v201
    %v203 = vsel %vm200, %v202, %v198
    %v204 = vmul.f32 %v168, %v203
    %205 = vrot.lane.b32.xlu0 %v109, 64
    %v206 = vpop.permute.xlu0 %205
    %207 = vrot.lane.b32.xlu0 %v112, 64
    %v208 = vpop.permute.xlu0 %207
    %v212 = vsel %vm156, %v189, 0
    %v215 = vsel %vm156, %v204, 0
    %217 = vmatpush.msra.mxu0 0.0
    %218 = vmatpush.msra.mxu0 0.0
    %219 = vmatpush.msra.mxu0 0.0
    %220 = vmatpush.msra.mxu0 0.0
    %221 = vmatpush.msra.mxu0 0.0
    %222 = vmatpush.msra.mxu0 0.0
    %223 = vmatpush.msra.mxu0 0.0
    %224 = vmatpush.msra.mxu0 0.0
    %225 = vmatpush.msra.mxu0 0.0
    %226 = vmatpush.msra.mxu0 0.0
    %227 = vmatpush.msra.mxu0 0.0
    %228 = vmatpush.msra.mxu0 0.0
    %229 = vmatpush.msra.mxu0 0.0
    %230 = vmatpush.msra.mxu0 0.0
    %231 = vmatpush.msra.mxu0 %v208
    %232 = vmatpush.msra.mxu0 %v206
    %233 = vmatmul.f32.gmra.mxu0 %v212
    %v234 = vpop.f32.mrf.mxu0
    %v235 = vadd.f32 0.0, %v234
    %236 = vmatmul.f32.gmra.mxu0 %v215
    %v237 = vpop.f32.mrf.mxu0
    %v238 = vadd.f32 0.0, %v237
    %239 = vdwg.mxu0
    %240 = vrot.lane.b32.xlu0 %v109, 120
    %v241 = vpop.permute.xlu0 %240
    %242 = vrot.lane.b32.xlu0 %v112, 120
    %v243 = vpop.permute.xlu0 %242
    %244 = vrot.lane.b32.xlu0 %v109, 88
    %v245 = vpop.permute.xlu0 %244
    %246 = vrot.lane.b32.xlu0 %v112, 88
    %v247 = vpop.permute.xlu0 %246
    %v248 = vsel %vm120, %v241, 0
    %v250 = vsel %vm120, %v243, 0
    %v252 = vsel %vm120, %v245, 0
    %v254 = vsel %vm120, %v247, 0
    %256 = vmatpush.xpose.msra.mxu0 0.0
    %257 = vmatpush.xpose.msra.mxu0 0.0
    %258 = vmatpush.xpose.msra.mxu0 0.0
    %259 = vmatpush.xpose.msra.mxu0 0.0
    %260 = vmatpush.xpose.msra.mxu0 0.0
    %261 = vmatpush.xpose.msra.mxu0 0.0
    %262 = vmatpush.xpose.msra.mxu0 0.0
    %263 = vmatpush.xpose.msra.mxu0 0.0
    %264 = vmatpush.xpose.msra.mxu0 0.0
    %265 = vmatpush.xpose.msra.mxu0 0.0
    %266 = vmatpush.xpose.msra.mxu0 0.0
    %267 = vmatpush.xpose.msra.mxu0 0.0
    %268 = vmatpush.xpose.msra.mxu0 0.0
    %269 = vmatpush.xpose.msra.mxu0 0.0
    %270 = vmatpush.xpose.msra.mxu0 %v254
    %271 = vmatpush.xpose.msra.mxu0 %v252
    %272 = vmatmul.f32.gmra.mxu0 %v248
    %v273 = vpop.f32.mrf.mxu0
    %v274 = vadd.f32 0.0, %v273
    %275 = vmatmul.f32.gmra.mxu0 %v250
    %v276 = vpop.f32.mrf.mxu0
    %v277 = vadd.f32 0.0, %v276
    %278 = vdwg.mxu0
    %v279 = vmul.f32 %v274, 0.35355338
    %v280 = vmul.f32 %v277, 0.35355338
    %v281 = vadd.f32 %v279, %v81
    %v282 = vadd.f32 %v280, %v82
    %v283 = vsel %vm156, %v281, -inf
    %284 = vmax.xlane.f32.xlu0 %v283
    %v285 = vpop.xlane.xlu0 %284
    %v286 = vsel %vm156, %v282, -inf
    %287 = vmax.xlane.f32.xlu0 %v286
    %v288 = vpop.xlane.xlu0 %287
    %v289 = vsub.f32 %v281, %v285
    %v290 = vsub.f32 %v282, %v288
    %v291 = vmul.f32 %v289, 1.442695
    %v292 = vpow.pop %v291
    %v293 = vmul.f32 %v290, 1.442695
    %v294 = vpow.pop %v293
    %v295 = vsel %vm156, %v292, 0.0
    %296 = vadd.xlane.f32.xlu0 %v295
    %v297 = vpop.xlane.xlu0 %296
    %v298 = vsel %vm156, %v294, 0.0
    %299 = vadd.xlane.f32.xlu0 %v298
    %v300 = vpop.xlane.xlu0 %299
    %v301 = vrcp.pop %v297
    %v302 = vmul.f32 %v297, %v301
    %v303 = vsub.f32 1.0, %v302
    %v304 = vmul.f32 %v301, %v303
    %v305 = vadd.f32 %v301, %v304
    %vm306 = vweird.f32 %v297
    %vm307 = vweird.f32 %v301
    %vm308 = vmor %vm306, %vm307
    %v309 = vsel %vm308, %v301, %v305
    %v310 = vand.u32 2147483647, %v297
    %vm311 = vcmp.eq.f32.partialorder %v310, 8.507059e+37
    %v312 = vand.u32 %v297, 2147483648
    %v313 = vor.u32 1.1754944e-38, %v312
    %v314 = vsel %vm311, %v313, %v309
    %v315 = vmul.f32 %v292, %v314
    %v316 = vrcp.pop %v300
    %v317 = vmul.f32 %v300, %v316
    %v318 = vsub.f32 1.0, %v317
    %v319 = vmul.f32 %v316, %v318
    %v320 = vadd.f32 %v316, %v319
    %vm321 = vweird.f32 %v300
    %vm322 = vweird.f32 %v316
    %vm323 = vmor %vm321, %vm322
    %v324 = vsel %vm323, %v316, %v320
    %v325 = vand.u32 2147483647, %v300
    %vm326 = vcmp.eq.f32.partialorder %v325, 8.507059e+37
    %v327 = vand.u32 %v300, 2147483648
    %v328 = vor.u32 1.1754944e-38, %v327
    %v329 = vsel %vm326, %v328, %v324
    %v330 = vmul.f32 %v294, %v329
    %331 = vrot.lane.b32.xlu0 %v109, 56
    %v332 = vpop.permute.xlu0 %331
    %333 = vrot.lane.b32.xlu0 %v112, 56
    %v334 = vpop.permute.xlu0 %333
    %v338 = vsel %vm156, %v315, 0
    %v341 = vsel %vm156, %v330, 0
    %343 = vmatpush.msra.mxu0 0.0
    %344 = vmatpush.msra.mxu0 0.0
    %345 = vmatpush.msra.mxu0 0.0
    %346 = vmatpush.msra.mxu0 0.0
    %347 = vmatpush.msra.mxu0 0.0
    %348 = vmatpush.msra.mxu0 0.0
    %349 = vmatpush.msra.mxu0 0.0
    %350 = vmatpush.msra.mxu0 0.0
    %351 = vmatpush.msra.mxu0 0.0
    %352 = vmatpush.msra.mxu0 0.0
    %353 = vmatpush.msra.mxu0 0.0
    %354 = vmatpush.msra.mxu0 0.0
    %355 = vmatpush.msra.mxu0 0.0
    %356 = vmatpush.msra.mxu0 0.0
    %357 = vmatpush.msra.mxu0 %v334
    %358 = vmatpush.msra.mxu0 %v332
    %359 = vmatmul.f32.gmra.mxu0 %v338
    %v360 = vpop.f32.mrf.mxu0
    %v361 = vadd.f32 0.0, %v360
    %362 = vmatmul.f32.gmra.mxu0 %v341
    %v363 = vpop.f32.mrf.mxu0
    %v364 = vadd.f32 0.0, %v363
    %365 = vdwg.mxu0
    %366 = vrot.lane.b32.xlu0 %v109, 112
    %v367 = vpop.permute.xlu0 %366
    %368 = vrot.lane.b32.xlu0 %v112, 112
    %v369 = vpop.permute.xlu0 %368
    %370 = vrot.lane.b32.xlu0 %v109, 80
    %v371 = vpop.permute.xlu0 %370
    %372 = vrot.lane.b32.xlu0 %v112, 80
    %v373 = vpop.permute.xlu0 %372
    %v374 = vsel %vm120, %v367, 0
    %v376 = vsel %vm120, %v369, 0
    %v378 = vsel %vm120, %v371, 0
    %v380 = vsel %vm120, %v373, 0
    %382 = vmatpush.xpose.msra.mxu0 0.0
    %383 = vmatpush.xpose.msra.mxu0 0.0
    %384 = vmatpush.xpose.msra.mxu0 0.0
    %385 = vmatpush.xpose.msra.mxu0 0.0
    %386 = vmatpush.xpose.msra.mxu0 0.0
    %387 = vmatpush.xpose.msra.mxu0 0.0
    %388 = vmatpush.xpose.msra.mxu0 0.0
    %389 = vmatpush.xpose.msra.mxu0 0.0
    %390 = vmatpush.xpose.msra.mxu0 0.0
    %391 = vmatpush.xpose.msra.mxu0 0.0
    %392 = vmatpush.xpose.msra.mxu0 0.0
    %393 = vmatpush.xpose.msra.mxu0 0.0
    %394 = vmatpush.xpose.msra.mxu0 0.0
    %395 = vmatpush.xpose.msra.mxu0 0.0
    %396 = vmatpush.xpose.msra.mxu0 %v380
    %397 = vmatpush.xpose.msra.mxu0 %v378
    %398 = vmatmul.f32.gmra.mxu0 %v374
    %v399 = vpop.f32.mrf.mxu0
    %v400 = vadd.f32 0.0, %v399
    %401 = vmatmul.f32.gmra.mxu0 %v376
    %v402 = vpop.f32.mrf.mxu0
    %v403 = vadd.f32 0.0, %v402
    %404 = vdwg.mxu0
    %v405 = vmul.f32 %v400, 0.35355338
    %v406 = vmul.f32 %v403, 0.35355338
    %v407 = vadd.f32 %v405, %v81
    %v408 = vadd.f32 %v406, %v82
    %v409 = vsel %vm156, %v407, -inf
    %410 = vmax.xlane.f32.xlu0 %v409
    %v411 = vpop.xlane.xlu0 %410
    %v412 = vsel %vm156, %v408, -inf
    %413 = vmax.xlane.f32.xlu0 %v412
    %v414 = vpop.xlane.xlu0 %413
    %v415 = vsub.f32 %v407, %v411
    %v416 = vsub.f32 %v408, %v414
    %v417 = vmul.f32 %v415, 1.442695
    %v418 = vpow.pop %v417
    %v419 = vmul.f32 %v416, 1.442695
    %v420 = vpow.pop %v419
    %v421 = vsel %vm156, %v418, 0.0
    %422 = vadd.xlane.f32.xlu0 %v421
    %v423 = vpop.xlane.xlu0 %422
    %v424 = vsel %vm156, %v420, 0.0
    %425 = vadd.xlane.f32.xlu0 %v424
    %v426 = vpop.xlane.xlu0 %425
    %v427 = vrcp.pop %v423
    %v428 = vmul.f32 %v423, %v427
    %v429 = vsub.f32 1.0, %v428
    %v430 = vmul.f32 %v427, %v429
    %v431 = vadd.f32 %v427, %v430
    %vm432 = vweird.f32 %v423
    %vm433 = vweird.f32 %v427
    %vm434 = vmor %vm432, %vm433
    %v435 = vsel %vm434, %v427, %v431
    %v436 = vand.u32 2147483647, %v423
    %vm437 = vcmp.eq.f32.partialorder %v436, 8.507059e+37
    %v438 = vand.u32 %v423, 2147483648
    %v439 = vor.u32 1.1754944e-38, %v438
    %v440 = vsel %vm437, %v439, %v435
    %v441 = vmul.f32 %v418, %v440
    %v442 = vrcp.pop %v426
    %v443 = vmul.f32 %v426, %v442
    %v444 = vsub.f32 1.0, %v443
    %v445 = vmul.f32 %v442, %v444
    %v446 = vadd.f32 %v442, %v445
    %vm447 = vweird.f32 %v426
    %vm448 = vweird.f32 %v442
    %vm449 = vmor %vm447, %vm448
    %v450 = vsel %vm449, %v442, %v446
    %v451 = vand.u32 2147483647, %v426
    %vm452 = vcmp.eq.f32.partialorder %v451, 8.507059e+37
    %v453 = vand.u32 %v426, 2147483648
    %v454 = vor.u32 1.1754944e-38, %v453
    %v455 = vsel %vm452, %v454, %v450
    %v456 = vmul.f32 %v420, %v455
    %457 = vrot.lane.b32.xlu0 %v109, 48
    %v458 = vpop.permute.xlu0 %457
    %459 = vrot.lane.b32.xlu0 %v112, 48
    %v460 = vpop.permute.xlu0 %459
    %v464 = vsel %vm156, %v441, 0
    %v467 = vsel %vm156, %v456, 0
    %469 = vmatpush.msra.mxu0 0.0
    %470 = vmatpush.msra.mxu0 0.0
    %471 = vmatpush.msra.mxu0 0.0
    %472 = vmatpush.msra.mxu0 0.0
    %473 = vmatpush.msra.mxu0 0.0
    %474 = vmatpush.msra.mxu0 0.0
    %475 = vmatpush.msra.mxu0 0.0
    %476 = vmatpush.msra.mxu0 0.0
    %477 = vmatpush.msra.mxu0 0.0
    %478 = vmatpush.msra.mxu0 0.0
    %479 = vmatpush.msra.mxu0 0.0
    %480 = vmatpush.msra.mxu0 0.0
    %481 = vmatpush.msra.mxu0 0.0
    %482 = vmatpush.msra.mxu0 0.0
    %483 = vmatpush.msra.mxu0 %v460
    %484 = vmatpush.msra.mxu0 %v458
    %485 = vmatmul.f32.gmra.mxu0 %v464
    %v486 = vpop.f32.mrf.mxu0
    %v487 = vadd.f32 0.0, %v486
    %488 = vmatmul.f32.gmra.mxu0 %v467
    %v489 = vpop.f32.mrf.mxu0
    %v490 = vadd.f32 0.0, %v489
    %491 = vdwg.mxu0
    %492 = vrot.lane.b32.xlu0 %v109, 104
    %v493 = vpop.permute.xlu0 %492
    %494 = vrot.lane.b32.xlu0 %v112, 104
    %v495 = vpop.permute.xlu0 %494
    %496 = vrot.lane.b32.xlu0 %v109, 72
    %v497 = vpop.permute.xlu0 %496
    %498 = vrot.lane.b32.xlu0 %v112, 72
    %v499 = vpop.permute.xlu0 %498
    %v500 = vsel %vm120, %v493, 0
    %v502 = vsel %vm120, %v495, 0
    %v504 = vsel %vm120, %v497, 0
    %v506 = vsel %vm120, %v499, 0
    %508 = vmatpush.xpose.msra.mxu0 0.0
    %509 = vmatpush.xpose.msra.mxu0 0.0
    %510 = vmatpush.xpose.msra.mxu0 0.0
    %511 = vmatpush.xpose.msra.mxu0 0.0
    %512 = vmatpush.xpose.msra.mxu0 0.0
    %513 = vmatpush.xpose.msra.mxu0 0.0
    %514 = vmatpush.xpose.msra.mxu0 0.0
    %515 = vmatpush.xpose.msra.mxu0 0.0
    %516 = vmatpush.xpose.msra.mxu0 0.0
    %517 = vmatpush.xpose.msra.mxu0 0.0
    %518 = vmatpush.xpose.msra.mxu0 0.0
    %519 = vmatpush.xpose.msra.mxu0 0.0
    %520 = vmatpush.xpose.msra.mxu0 0.0
    %521 = vmatpush.xpose.msra.mxu0 0.0
    %522 = vmatpush.xpose.msra.mxu0 %v506
    %523 = vmatpush.xpose.msra.mxu0 %v504
    %524 = vmatmul.f32.gmra.mxu0 %v500
    %v525 = vpop.f32.mrf.mxu0
    %v526 = vadd.f32 0.0, %v525
    %527 = vmatmul.f32.gmra.mxu0 %v502
    %v528 = vpop.f32.mrf.mxu0
    %v529 = vadd.f32 0.0, %v528
    %530 = vdwg.mxu0
    %v531 = vmul.f32 %v526, 0.35355338
    %v532 = vmul.f32 %v529, 0.35355338
    %v533 = vadd.f32 %v531, %v81
    %v534 = vadd.f32 %v532, %v82
    %v535 = vsel %vm156, %v533, -inf
    %536 = vmax.xlane.f32.xlu0 %v535
    %v537 = vpop.xlane.xlu0 %536
    %v538 = vsel %vm156, %v534, -inf
    %539 = vmax.xlane.f32.xlu0 %v538
    %v540 = vpop.xlane.xlu0 %539
    %v541 = vsub.f32 %v533, %v537
    %v542 = vsub.f32 %v534, %v540
    %v543 = vmul.f32 %v541, 1.442695
    %v544 = vpow.pop %v543
    %v545 = vmul.f32 %v542, 1.442695
    %v546 = vpow.pop %v545
    %v547 = vsel %vm156, %v544, 0.0
    %548 = vadd.xlane.f32.xlu0 %v547
    %v549 = vpop.xlane.xlu0 %548
    %v550 = vsel %vm156, %v546, 0.0
    %551 = vadd.xlane.f32.xlu0 %v550
    %v552 = vpop.xlane.xlu0 %551
    %v553 = vrcp.pop %v549
    %v554 = vmul.f32 %v549, %v553
    %v555 = vsub.f32 1.0, %v554
    %v556 = vmul.f32 %v553, %v555
    %v557 = vadd.f32 %v553, %v556
    %vm558 = vweird.f32 %v549
    %vm559 = vweird.f32 %v553
    %vm560 = vmor %vm558, %vm559
    %v561 = vsel %vm560, %v553, %v557
    %v562 = vand.u32 2147483647, %v549
    %vm563 = vcmp.eq.f32.partialorder %v562, 8.507059e+37
    %v564 = vand.u32 %v549, 2147483648
    %v565 = vor.u32 1.1754944e-38, %v564
    %v566 = vsel %vm563, %v565, %v561
    %v567 = vmul.f32 %v544, %v566
    %v568 = vrcp.pop %v552
    %v569 = vmul.f32 %v552, %v568
    %v570 = vsub.f32 1.0, %v569
    %v571 = vmul.f32 %v568, %v570
    %v572 = vadd.f32 %v568, %v571
    %vm573 = vweird.f32 %v552
    %vm574 = vweird.f32 %v568
    %vm575 = vmor %vm573, %vm574
    %v576 = vsel %vm575, %v568, %v572
    %v577 = vand.u32 2147483647, %v552
    %vm578 = vcmp.eq.f32.partialorder %v577, 8.507059e+37
    %v579 = vand.u32 %v552, 2147483648
    %v580 = vor.u32 1.1754944e-38, %v579
    %v581 = vsel %vm578, %v580, %v576
    %v582 = vmul.f32 %v546, %v581
    %583 = vrot.lane.b32.xlu0 %v109, 40
    %v584 = vpop.permute.xlu0 %583
    %585 = vrot.lane.b32.xlu0 %v112, 40
    %v586 = vpop.permute.xlu0 %585
    %v590 = vsel %vm156, %v567, 0
    %v593 = vsel %vm156, %v582, 0
    %595 = vmatpush.msra.mxu0 0.0
    %596 = vmatpush.msra.mxu0 0.0
    %597 = vmatpush.msra.mxu0 0.0
    %598 = vmatpush.msra.mxu0 0.0
    %599 = vmatpush.msra.mxu0 0.0
    %600 = vmatpush.msra.mxu0 0.0
    %601 = vmatpush.msra.mxu0 0.0
    %602 = vmatpush.msra.mxu0 0.0
    %603 = vmatpush.msra.mxu0 0.0
    %604 = vmatpush.msra.mxu0 0.0
    %605 = vmatpush.msra.mxu0 0.0
    %606 = vmatpush.msra.mxu0 0.0
    %607 = vmatpush.msra.mxu0 0.0
    %608 = vmatpush.msra.mxu0 0.0
    %609 = vmatpush.msra.mxu0 %v586
    %610 = vmatpush.msra.mxu0 %v584
    %611 = vmatmul.f32.gmra.mxu0 %v590
    %v612 = vpop.f32.mrf.mxu0
    %v613 = vadd.f32 0.0, %v612
    %614 = vmatmul.f32.gmra.mxu0 %v593
    %v615 = vpop.f32.mrf.mxu0
    %v616 = vadd.f32 0.0, %v615
    %617 = vdwg.mxu0
    %620 = vrot.lane.b32.xlu0 %v361, 8
    %v621 = vpop.permute.xlu0 %620
    %622 = vrot.lane.b32.xlu0 %v364, 8
    %v623 = vpop.permute.xlu0 %622
    %628 = vrot.lane.b32.xlu0 %v487, 16
    %v629 = vpop.permute.xlu0 %628
    %630 = vrot.lane.b32.xlu0 %v490, 16
    %v631 = vpop.permute.xlu0 %630
    %636 = vrot.lane.b32.xlu0 %v613, 24
    %v637 = vpop.permute.xlu0 %636
    %638 = vrot.lane.b32.xlu0 %v616, 24
    %v639 = vpop.permute.xlu0 %638
    %v642 = vsel %vm120, %v235, %v621
    %v643 = vsel %vm120, %v238, %v623
    %v644 = vsel %vm156, %v642, %v629
    %v645 = vsel %vm156, %v643, %v631
    %vm646 = vcmask 195584
    %v647 = vsel %vm646, %v644, %v637
    %v648 = vsel %vm646, %v645, %v639
    %v649 = vperm.slane %v57, 0
    %v651 = vsel %vm84, %v647, 0
    %v654 = vsel %vm84, %v648, 0
    %656 = vmatpush.msra.mxu0 0.0
    %657 = vmatpush.msra.mxu0 0.0
    %658 = vmatpush.msra.mxu0 0.0
    %659 = vmatpush.msra.mxu0 0.0
    %660 = vmatpush.msra.mxu0 0.0
    %661 = vmatpush.msra.mxu0 0.0
    %662 = vmatpush.msra.mxu0 0.0
    %663 = vmatpush.msra.mxu0 0.0
    %664 = vmatpush.msra.mxu0 0.0
    %665 = vmatpush.msra.mxu0 0.0
    %666 = vmatpush.msra.mxu0 0.0
    %667 = vmatpush.msra.mxu0 0.0
    %668 = vmatpush.msra.mxu0 %v43
    %669 = vmatpush.msra.mxu0 %v42
    %670 = vmatpush.msra.mxu0 %v41
    %671 = vmatpush.msra.mxu0 %v40
    %672 = vmatmul.f32.gmra.mxu0 %v651
    %v673 = vpop.f32.mrf.mxu0
    %v674 = vadd.f32 %v649, %v673
    %675 = vmatmul.f32.gmra.mxu0 %v654
    %v676 = vpop.f32.mrf.mxu0
    %v677 = vadd.f32 %v649, %v676
    %678 = vdwg.mxu0
    %v679 = vadd.f32 %v66, %v674
    %v680 = vadd.f32 %v67, %v677
    %v681 = vsel %vm84, %v679, 0.0
    %682 = vadd.xlane.f32.xlu0 %v681
    %v683 = vpop.xlane.xlu0 %682
    %v684 = vsel %vm84, %v680, 0.0
    %685 = vadd.xlane.f32.xlu0 %v684
    %v686 = vpop.xlane.xlu0 %685
    %v687 = vrcp.pop 32.0
    %v688 = vmul.f32 32.0, %v687
    %v689 = vsub.f32 1.0, %v688
    %v690 = vmul.f32 %v687, %v689
    %v691 = vadd.f32 %v687, %v690
    %vm692 = vweird.f32 %v687
    %v693 = vsel %vm692, %v687, %v691
    %v694 = vmul.f32 %v683, %v693
    %v695 = vmul.f32 %v686, %v693
    %v696 = vsub.f32 %v679, %v694
    %v697 = vsub.f32 %v680, %v695
    %v698 = vmul.f32 %v696, %v696
    %v699 = vmul.f32 %v697, %v697
    %v700 = vsel %vm84, %v698, 0.0
    %701 = vadd.xlane.f32.xlu0 %v700
    %v702 = vpop.xlane.xlu0 %701
    %v703 = vsel %vm84, %v699, 0.0
    %704 = vadd.xlane.f32.xlu0 %v703
    %v705 = vpop.xlane.xlu0 %704
    %v706 = vmul.f32 %v702, %v693
    %v707 = vmul.f32 %v705, %v693
    %v708 = vadd.f32 %v706, 1e-05
    %v709 = vadd.f32 %v707, 1e-05
    %v710 = vrsqrt.pop %v708
    %v711 = vmul.f32 %v710, %v708
    %v712 = vmul.f32 %v711, %v710
    %v713 = vmul.f32 0.5, %v712
    %v714 = vsub.f32 1.5, %v713
    %v715 = vmul.f32 %v710, %v714
    %vm716 = vweird.f32 %v708
    %vm717 = vweird.f32 %v710
    %vm718 = vmor %vm716, %vm717
    %v719 = vsel %vm718, %v710, %v715
    %v720 = vrsqrt.pop %v709
    %v721 = vmul.f32 %v720, %v709
    %v722 = vmul.f32 %v721, %v720
    %v723 = vmul.f32 0.5, %v722
    %v724 = vsub.f32 1.5, %v723
    %v725 = vmul.f32 %v720, %v724
    %vm726 = vweird.f32 %v709
    %vm727 = vweird.f32 %v720
    %vm728 = vmor %vm726, %vm727
    %v729 = vsel %vm728, %v720, %v725
    %v730 = vmul.f32 %v696, %v719
    %v731 = vmul.f32 %v697, %v729
    %v732 = vperm.slane %v60, 0
    %v733 = vmul.f32 %v730, %v732
    %v734 = vmul.f32 %v731, %v732
    %v735 = vperm.slane %v61, 0
    %v736 = vadd.f32 %v733, %v735
    %v737 = vadd.f32 %v734, %v735
    %v738 = vperm.slane %v56, 0
    %v740 = vsel %vm84, %v736, 0
    %v743 = vsel %vm84, %v737, 0
    %745 = vmatpush.msra.mxu0 0.0
    %746 = vmatpush.msra.mxu0 0.0
    %747 = vmatpush.msra.mxu0 0.0
    %748 = vmatpush.msra.mxu0 0.0
    %749 = vmatpush.msra.mxu0 0.0
    %750 = vmatpush.msra.mxu0 0.0
    %751 = vmatpush.msra.mxu0 0.0
    %752 = vmatpush.msra.mxu0 0.0
    %753 = vmatpush.msra.mxu0 0.0
    %754 = vmatpush.msra.mxu0 0.0
    %755 = vmatpush.msra.mxu0 0.0
    %756 = vmatpush.msra.mxu0 0.0
    %757 = vmatpush.msra.mxu0 %v39
    %758 = vmatpush.msra.mxu0 %v38
    %759 = vmatpush.msra.mxu0 %v37
    %760 = vmatpush.msra.mxu0 %v36
    %761 = vmatmul.f32.gmra.mxu0 %v740
    %v762 = vpop.f32.mrf.mxu0
    %v763 = vadd.f32 %v738, %v762
    %764 = vmatmul.f32.gmra.mxu0 %v743
    %v765 = vpop.f32.mrf.mxu0
    %v766 = vadd.f32 %v738, %v765
    %767 = vdwg.mxu0
    %v768 = vperm.slane %v34, 0
    %v770 = vsel %vm84, %v68, 0
    %v773 = vsel %vm84, %v69, 0
    %v776 = vsel %vm84, %v70, 0
    %778 = vmatpush.msra.mxu0 0.0
    %779 = vmatpush.msra.mxu0 0.0
    %780 = vmatpush.msra.mxu0 0.0
    %781 = vmatpush.msra.mxu0 0.0
    %782 = vmatpush.msra.mxu0 0.0
    %783 = vmatpush.msra.mxu0 0.0
    %784 = vmatpush.msra.mxu0 0.0
    %785 = vmatpush.msra.mxu0 0.0
    %786 = vmatpush.msra.mxu0 0.0
    %787 = vmatpush.msra.mxu0 0.0
    %788 = vmatpush.msra.mxu0 0.0
    %789 = vmatpush.msra.mxu0 0.0
    %790 = vmatpush.msra.mxu0 %v29
    %791 = vmatpush.msra.mxu0 %v28
    %792 = vmatpush.msra.mxu0 %v27
    %793 = vmatpush.msra.mxu0 %v26
    %794 = vmatmul.f32.gmra.mxu0 %v770
    %v795 = vpop.f32.mrf.mxu0
    %v796 = vadd.f32 %v768, %v795
    %797 = vmatmul.f32.gmra.mxu0 %v773
    %v798 = vpop.f32.mrf.mxu0
    %v799 = vadd.f32 %v768, %v798
    %800 = vmatmul.f32.gmra.mxu0 %v776
    %v801 = vpop.f32.mrf.mxu0
    %v802 = vadd.f32 %v768, %v801
    %803 = vdwg.mxu0
    %v805 = vsel %vm120, %v763, 0
    %v808 = vsel %vm120, %v766, 0
    %v811 = vsel %vm120, %v796, 0
    %v814 = vsel %vm120, %v799, 0
    %v817 = vsel %vm120, %v802, 0
    %819 = vmatpush.xpose.msra.mxu0 0.0
    %820 = vmatpush.xpose.msra.mxu0 0.0
    %821 = vmatpush.xpose.msra.mxu0 0.0
    %822 = vmatpush.xpose.msra.mxu0 0.0
    %823 = vmatpush.xpose.msra.mxu0 0.0
    %824 = vmatpush.xpose.msra.mxu0 0.0
    %825 = vmatpush.xpose.msra.mxu0 0.0
    %826 = vmatpush.xpose.msra.mxu0 0.0
    %827 = vmatpush.xpose.msra.mxu0 0.0
    %828 = vmatpush.xpose.msra.mxu0 0.0
    %829 = vmatpush.xpose.msra.mxu0 0.0
    %830 = vmatpush.xpose.msra.mxu0 0.0
    %831 = vmatpush.xpose.msra.mxu0 0.0
    %832 = vmatpush.xpose.msra.mxu0 %v817
    %833 = vmatpush.xpose.msra.mxu0 %v814
    %834 = vmatpush.xpose.msra.mxu0 %v811
    %835 = vmatmul.f32.gmra.mxu0 %v805
    %v836 = vpop.f32.mrf.mxu0
    %v837 = vadd.f32 0.0, %v836
    %838 = vmatmul.f32.gmra.mxu0 %v808
    %v839 = vpop.f32.mrf.mxu0
    %v840 = vadd.f32 0.0, %v839
    %841 = vdwg.mxu0
    %v842 = vmul.f32 %v837, 0.35355338
    %v843 = vmul.f32 %v840, 0.35355338
    %v844 = vadd.f32 %v842, %v81
    %v845 = vadd.f32 %v843, %v82
    %vm846 = vcmask 162816
    %v847 = vsel %vm846, %v844, -inf
    %848 = vmax.xlane.f32.xlu0 %v847
    %v849 = vpop.xlane.xlu0 %848
    %v850 = vsel %vm846, %v845, -inf
    %851 = vmax.xlane.f32.xlu0 %v850
    %v852 = vpop.xlane.xlu0 %851
    %v853 = vsub.f32 %v844, %v849
    %v854 = vsub.f32 %v845, %v852
    %v855 = vmul.f32 %v853, 1.442695
    %v856 = vpow.pop %v855
    %v857 = vmul.f32 %v854, 1.442695
    %v858 = vpow.pop %v857
    %v859 = vsel %vm846, %v856, 0.0
    %860 = vadd.xlane.f32.xlu0 %v859
    %v861 = vpop.xlane.xlu0 %860
    %v862 = vsel %vm846, %v858, 0.0
    %863 = vadd.xlane.f32.xlu0 %v862
    %v864 = vpop.xlane.xlu0 %863
    %v865 = vrcp.pop %v861
    %v866 = vmul.f32 %v861, %v865
    %v867 = vsub.f32 1.0, %v866
    %v868 = vmul.f32 %v865, %v867
    %v869 = vadd.f32 %v865, %v868
    %vm870 = vweird.f32 %v861
    %vm871 = vweird.f32 %v865
    %vm872 = vmor %vm870, %vm871
    %v873 = vsel %vm872, %v865, %v869
    %v874 = vand.u32 2147483647, %v861
    %vm875 = vcmp.eq.f32.partialorder %v874, 8.507059e+37
    %v876 = vand.u32 %v861, 2147483648
    %v877 = vor.u32 1.1754944e-38, %v876
    %v878 = vsel %vm875, %v877, %v873
    %v879 = vmul.f32 %v856, %v878
    %v880 = vrcp.pop %v864
    %v881 = vmul.f32 %v864, %v880
    %v882 = vsub.f32 1.0, %v881
    %v883 = vmul.f32 %v880, %v882
    %v884 = vadd.f32 %v880, %v883
    %vm885 = vweird.f32 %v864
    %vm886 = vweird.f32 %v880
    %vm887 = vmor %vm885, %vm886
    %v888 = vsel %vm887, %v880, %v884
    %v889 = vand.u32 2147483647, %v864
    %vm890 = vcmp.eq.f32.partialorder %v889, 8.507059e+37
    %v891 = vand.u32 %v864, 2147483648
    %v892 = vor.u32 1.1754944e-38, %v891
    %v893 = vsel %vm890, %v892, %v888
    %v894 = vmul.f32 %v858, %v893
    %895 = vrot.lane.b32.xlu0 %v796, 96
    %v896 = vpop.permute.xlu0 %895
    %897 = vrot.lane.b32.xlu0 %v799, 96
    %v898 = vpop.permute.xlu0 %897
    %899 = vrot.lane.b32.xlu0 %v802, 96
    %v900 = vpop.permute.xlu0 %899
    %v904 = vsel %vm846, %v879, 0
    %v907 = vsel %vm846, %v894, 0
    %vm909 = vcmask 1043456
    %v910 = vsel %vm909, %v900, 0
    %912 = vmatpush.msra.mxu0 0.0
    %913 = vmatpush.msra.mxu0 0.0
    %914 = vmatpush.msra.mxu0 0.0
    %915 = vmatpush.msra.mxu0 0.0
    %916 = vmatpush.msra.mxu0 0.0
    %917 = vmatpush.msra.mxu0 0.0
    %918 = vmatpush.msra.mxu0 0.0
    %919 = vmatpush.msra.mxu0 0.0
    %920 = vmatpush.msra.mxu0 0.0
    %921 = vmatpush.msra.mxu0 0.0
    %922 = vmatpush.msra.mxu0 0.0
    %923 = vmatpush.msra.mxu0 0.0
    %924 = vmatpush.msra.mxu0 0.0
    %925 = vmatpush.msra.mxu0 %v910
    %926 = vmatpush.msra.mxu0 %v898
    %927 = vmatpush.msra.mxu0 %v896
    %928 = vmatmul.f32.gmra.mxu0 %v904
    %v929 = vpop.f32.mrf.mxu0
    %v930 = vadd.f32 0.0, %v929
    %931 = vmatmul.f32.gmra.mxu0 %v907
    %v932 = vpop.f32.mrf.mxu0
    %v933 = vadd.f32 0.0, %v932
    %934 = vdwg.mxu0
    %935 = vrot.lane.b32.xlu0 %v763, 120
    %v936 = vpop.permute.xlu0 %935
    %937 = vrot.lane.b32.xlu0 %v766, 120
    %v938 = vpop.permute.xlu0 %937
    %939 = vrot.lane.b32.xlu0 %v796, 120
    %v940 = vpop.permute.xlu0 %939
    %941 = vrot.lane.b32.xlu0 %v799, 120
    %v942 = vpop.permute.xlu0 %941
    %943 = vrot.lane.b32.xlu0 %v802, 120
    %v944 = vpop.permute.xlu0 %943
    %v945 = vsel %vm120, %v936, 0
    %v947 = vsel %vm120, %v938, 0
    %v949 = vsel %vm120, %v940, 0
    %v951 = vsel %vm120, %v942, 0
    %v953 = vsel %vm120, %v944, 0
    %955 = vmatpush.xpose.msra.mxu0 0.0
    %956 = vmatpush.xpose.msra.mxu0 0.0
    %957 = vmatpush.xpose.msra.mxu0 0.0
    %958 = vmatpush.xpose.msra.mxu0 0.0
    %959 = vmatpush.xpose.msra.mxu0 0.0
    %960 = vmatpush.xpose.msra.mxu0 0.0
    %961 = vmatpush.xpose.msra.mxu0 0.0
    %962 = vmatpush.xpose.msra.mxu0 0.0
    %963 = vmatpush.xpose.msra.mxu0 0.0
    %964 = vmatpush.xpose.msra.mxu0 0.0
    %965 = vmatpush.xpose.msra.mxu0 0.0
    %966 = vmatpush.xpose.msra.mxu0 0.0
    %967 = vmatpush.xpose.msra.mxu0 0.0
    %968 = vmatpush.xpose.msra.mxu0 %v953
    %969 = vmatpush.xpose.msra.mxu0 %v951
    %970 = vmatpush.xpose.msra.mxu0 %v949
    %971 = vmatmul.f32.gmra.mxu0 %v945
    %v972 = vpop.f32.mrf.mxu0
    %v973 = vadd.f32 0.0, %v972
    %974 = vmatmul.f32.gmra.mxu0 %v947
    %v975 = vpop.f32.mrf.mxu0
    %v976 = vadd.f32 0.0, %v975
    %977 = vdwg.mxu0
    %v978 = vmul.f32 %v973, 0.35355338
    %v979 = vmul.f32 %v976, 0.35355338
    %v980 = vadd.f32 %v978, %v81
    %v981 = vadd.f32 %v979, %v82
    %v982 = vsel %vm846, %v980, -inf
    %983 = vmax.xlane.f32.xlu0 %v982
    %v984 = vpop.xlane.xlu0 %983
    %v985 = vsel %vm846, %v981, -inf
    %986 = vmax.xlane.f32.xlu0 %v985
    %v987 = vpop.xlane.xlu0 %986
    %v988 = vsub.f32 %v980, %v984
    %v989 = vsub.f32 %v981, %v987
    %v990 = vmul.f32 %v988, 1.442695
    %v991 = vpow.pop %v990
    %v992 = vmul.f32 %v989, 1.442695
    %v993 = vpow.pop %v992
    %v994 = vsel %vm846, %v991, 0.0
    %995 = vadd.xlane.f32.xlu0 %v994
    %v996 = vpop.xlane.xlu0 %995
    %v997 = vsel %vm846, %v993, 0.0
    %998 = vadd.xlane.f32.xlu0 %v997
    %v999 = vpop.xlane.xlu0 %998
    %v1000 = vrcp.pop %v996
    %v1001 = vmul.f32 %v996, %v1000
    %v1002 = vsub.f32 1.0, %v1001
    %v1003 = vmul.f32 %v1000, %v1002
    %v1004 = vadd.f32 %v1000, %v1003
    %vm1005 = vweird.f32 %v996
    %vm1006 = vweird.f32 %v1000
    %vm1007 = vmor %vm1005, %vm1006
    %v1008 = vsel %vm1007, %v1000, %v1004
    %v1009 = vand.u32 2147483647, %v996
    %vm1010 = vcmp.eq.f32.partialorder %v1009, 8.507059e+37
    %v1011 = vand.u32 %v996, 2147483648
    %v1012 = vor.u32 1.1754944e-38, %v1011
    %v1013 = vsel %vm1010, %v1012, %v1008
    %v1014 = vmul.f32 %v991, %v1013
    %v1015 = vrcp.pop %v999
    %v1016 = vmul.f32 %v999, %v1015
    %v1017 = vsub.f32 1.0, %v1016
    %v1018 = vmul.f32 %v1015, %v1017
    %v1019 = vadd.f32 %v1015, %v1018
    %vm1020 = vweird.f32 %v999
    %vm1021 = vweird.f32 %v1015
    %vm1022 = vmor %vm1020, %vm1021
    %v1023 = vsel %vm1022, %v1015, %v1019
    %v1024 = vand.u32 2147483647, %v999
    %vm1025 = vcmp.eq.f32.partialorder %v1024, 8.507059e+37
    %v1026 = vand.u32 %v999, 2147483648
    %v1027 = vor.u32 1.1754944e-38, %v1026
    %v1028 = vsel %vm1025, %v1027, %v1023
    %v1029 = vmul.f32 %v993, %v1028
    %1030 = vrot.lane.b32.xlu0 %v796, 88
    %v1031 = vpop.permute.xlu0 %1030
    %1032 = vrot.lane.b32.xlu0 %v799, 88
    %v1033 = vpop.permute.xlu0 %1032
    %1034 = vrot.lane.b32.xlu0 %v802, 88
    %v1035 = vpop.permute.xlu0 %1034
    %v1039 = vsel %vm846, %v1014, 0
    %v1042 = vsel %vm846, %v1029, 0
    %v1044 = vsel %vm909, %v1035, 0
    %1046 = vmatpush.msra.mxu0 0.0
    %1047 = vmatpush.msra.mxu0 0.0
    %1048 = vmatpush.msra.mxu0 0.0
    %1049 = vmatpush.msra.mxu0 0.0
    %1050 = vmatpush.msra.mxu0 0.0
    %1051 = vmatpush.msra.mxu0 0.0
    %1052 = vmatpush.msra.mxu0 0.0
    %1053 = vmatpush.msra.mxu0 0.0
    %1054 = vmatpush.msra.mxu0 0.0
    %1055 = vmatpush.msra.mxu0 0.0
    %1056 = vmatpush.msra.mxu0 0.0
    %1057 = vmatpush.msra.mxu0 0.0
    %1058 = vmatpush.msra.mxu0 0.0
    %1059 = vmatpush.msra.mxu0 %v1044
    %1060 = vmatpush.msra.mxu0 %v1033
    %1061 = vmatpush.msra.mxu0 %v1031
    %1062 = vmatmul.f32.gmra.mxu0 %v1039
    %v1063 = vpop.f32.mrf.mxu0
    %v1064 = vadd.f32 0.0, %v1063
    %1065 = vmatmul.f32.gmra.mxu0 %v1042
    %v1066 = vpop.f32.mrf.mxu0
    %v1067 = vadd.f32 0.0, %v1066
    %1068 = vdwg.mxu0
    %1069 = vrot.lane.b32.xlu0 %v763, 112
    %v1070 = vpop.permute.xlu0 %1069
    %1071 = vrot.lane.b32.xlu0 %v766, 112
    %v1072 = vpop.permute.xlu0 %1071
    %1073 = vrot.lane.b32.xlu0 %v796, 112
    %v1074 = vpop.permute.xlu0 %1073
    %1075 = vrot.lane.b32.xlu0 %v799, 112
    %v1076 = vpop.permute.xlu0 %1075
    %1077 = vrot.lane.b32.xlu0 %v802, 112
    %v1078 = vpop.permute.xlu0 %1077
    %v1079 = vsel %vm120, %v1070, 0
    %v1081 = vsel %vm120, %v1072, 0
    %v1083 = vsel %vm120, %v1074, 0
    %v1085 = vsel %vm120, %v1076, 0
    %v1087 = vsel %vm120, %v1078, 0
    %1089 = vmatpush.xpose.msra.mxu0 0.0
    %1090 = vmatpush.xpose.msra.mxu0 0.0
    %1091 = vmatpush.xpose.msra.mxu0 0.0
    %1092 = vmatpush.xpose.msra.mxu0 0.0
    %1093 = vmatpush.xpose.msra.mxu0 0.0
    %1094 = vmatpush.xpose.msra.mxu0 0.0
    %1095 = vmatpush.xpose.msra.mxu0 0.0
    %1096 = vmatpush.xpose.msra.mxu0 0.0
    %1097 = vmatpush.xpose.msra.mxu0 0.0
    %1098 = vmatpush.xpose.msra.mxu0 0.0
    %1099 = vmatpush.xpose.msra.mxu0 0.0
    %1100 = vmatpush.xpose.msra.mxu0 0.0
    %1101 = vmatpush.xpose.msra.mxu0 0.0
    %1102 = vmatpush.xpose.msra.mxu0 %v1087
    %1103 = vmatpush.xpose.msra.mxu0 %v1085
    %1104 = vmatpush.xpose.msra.mxu0 %v1083
    %1105 = vmatmul.f32.gmra.mxu0 %v1079
    %v1106 = vpop.f32.mrf.mxu0
    %v1107 = vadd.f32 0.0, %v1106
    %1108 = vmatmul.f32.gmra.mxu0 %v1081
    %v1109 = vpop.f32.mrf.mxu0
    %v1110 = vadd.f32 0.0, %v1109
    %1111 = vdwg.mxu0
    %v1112 = vmul.f32 %v1107, 0.35355338
    %v1113 = vmul.f32 %v1110, 0.35355338
    %v1114 = vadd.f32 %v1112, %v81
    %v1115 = vadd.f32 %v1113, %v82
    %v1116 = vsel %vm846, %v1114, -inf
    %1117 = vmax.xlane.f32.xlu0 %v1116
    %v1118 = vpop.xlane.xlu0 %1117
    %v1119 = vsel %vm846, %v1115, -inf
    %1120 = vmax.xlane.f32.xlu0 %v1119
    %v1121 = vpop.xlane.xlu0 %1120
    %v1122 = vsub.f32 %v1114, %v1118
    %v1123 = vsub.f32 %v1115, %v1121
    %v1124 = vmul.f32 %v1122, 1.442695
    %v1125 = vpow.pop %v1124
    %v1126 = vmul.f32 %v1123, 1.442695
    %v1127 = vpow.pop %v1126
    %v1128 = vsel %vm846, %v1125, 0.0
    %1129 = vadd.xlane.f32.xlu0 %v1128
    %v1130 = vpop.xlane.xlu0 %1129
    %v1131 = vsel %vm846, %v1127, 0.0
    %1132 = vadd.xlane.f32.xlu0 %v1131
    %v1133 = vpop.xlane.xlu0 %1132
    %v1134 = vrcp.pop %v1130
    %v1135 = vmul.f32 %v1130, %v1134
    %v1136 = vsub.f32 1.0, %v1135
    %v1137 = vmul.f32 %v1134, %v1136
    %v1138 = vadd.f32 %v1134, %v1137
    %vm1139 = vweird.f32 %v1130
    %vm1140 = vweird.f32 %v1134
    %vm1141 = vmor %vm1139, %vm1140
    %v1142 = vsel %vm1141, %v1134, %v1138
    %v1143 = vand.u32 2147483647, %v1130
    %vm1144 = vcmp.eq.f32.partialorder %v1143, 8.507059e+37
    %v1145 = vand.u32 %v1130, 2147483648
    %v1146 = vor.u32 1.1754944e-38, %v1145
    %v1147 = vsel %vm1144, %v1146, %v1142
    %v1148 = vmul.f32 %v1125, %v1147
    %v1149 = vrcp.pop %v1133
    %v1150 = vmul.f32 %v1133, %v1149
    %v1151 = vsub.f32 1.0, %v1150
    %v1152 = vmul.f32 %v1149, %v1151
    %v1153 = vadd.f32 %v1149, %v1152
    %vm1154 = vweird.f32 %v1133
    %vm1155 = vweird.f32 %v1149
    %vm1156 = vmor %vm1154, %vm1155
    %v1157 = vsel %vm1156, %v1149, %v1153
    %v1158 = vand.u32 2147483647, %v1133
    %vm1159 = vcmp.eq.f32.partialorder %v1158, 8.507059e+37
    %v1160 = vand.u32 %v1133, 2147483648
    %v1161 = vor.u32 1.1754944e-38, %v1160
    %v1162 = vsel %vm1159, %v1161, %v1157
    %v1163 = vmul.f32 %v1127, %v1162
    %1164 = vrot.lane.b32.xlu0 %v796, 80
    %v1165 = vpop.permute.xlu0 %1164
    %1166 = vrot.lane.b32.xlu0 %v799, 80
    %v1167 = vpop.permute.xlu0 %1166
    %1168 = vrot.lane.b32.xlu0 %v802, 80
    %v1169 = vpop.permute.xlu0 %1168
    %v1173 = vsel %vm846, %v1148, 0
    %v1176 = vsel %vm846, %v1163, 0
    %v1178 = vsel %vm909, %v1169, 0
    %1180 = vmatpush.msra.mxu0 0.0
    %1181 = vmatpush.msra.mxu0 0.0
    %1182 = vmatpush.msra.mxu0 0.0
    %1183 = vmatpush.msra.mxu0 0.0
    %1184 = vmatpush.msra.mxu0 0.0
    %1185 = vmatpush.msra.mxu0 0.0
    %1186 = vmatpush.msra.mxu0 0.0
    %1187 = vmatpush.msra.mxu0 0.0
    %1188 = vmatpush.msra.mxu0 0.0
    %1189 = vmatpush.msra.mxu0 0.0
    %1190 = vmatpush.msra.mxu0 0.0
    %1191 = vmatpush.msra.mxu0 0.0
    %1192 = vmatpush.msra.mxu0 0.0
    %1193 = vmatpush.msra.mxu0 %v1178
    %1194 = vmatpush.msra.mxu0 %v1167
    %1195 = vmatpush.msra.mxu0 %v1165
    %1196 = vmatmul.f32.gmra.mxu0 %v1173
    %v1197 = vpop.f32.mrf.mxu0
    %v1198 = vadd.f32 0.0, %v1197
    %1199 = vmatmul.f32.gmra.mxu0 %v1176
    %v1200 = vpop.f32.mrf.mxu0
    %v1201 = vadd.f32 0.0, %v1200
    %1202 = vdwg.mxu0
    %1203 = vrot.lane.b32.xlu0 %v763, 104
    %v1204 = vpop.permute.xlu0 %1203
    %1205 = vrot.lane.b32.xlu0 %v766, 104
    %v1206 = vpop.permute.xlu0 %1205
    %1207 = vrot.lane.b32.xlu0 %v796, 104
    %v1208 = vpop.permute.xlu0 %1207
    %1209 = vrot.lane.b32.xlu0 %v799, 104
    %v1210 = vpop.permute.xlu0 %1209
    %1211 = vrot.lane.b32.xlu0 %v802, 104
    %v1212 = vpop.permute.xlu0 %1211
    %v1213 = vsel %vm120, %v1204, 0
    %v1215 = vsel %vm120, %v1206, 0
    %v1217 = vsel %vm120, %v1208, 0
    %v1219 = vsel %vm120, %v1210, 0
    %v1221 = vsel %vm120, %v1212, 0
    %1223 = vmatpush.xpose.msra.mxu0 0.0
    %1224 = vmatpush.xpose.msra.mxu0 0.0
    %1225 = vmatpush.xpose.msra.mxu0 0.0
    %1226 = vmatpush.xpose.msra.mxu0 0.0
    %1227 = vmatpush.xpose.msra.mxu0 0.0
    %1228 = vmatpush.xpose.msra.mxu0 0.0
    %1229 = vmatpush.xpose.msra.mxu0 0.0
    %1230 = vmatpush.xpose.msra.mxu0 0.0
    %1231 = vmatpush.xpose.msra.mxu0 0.0
    %1232 = vmatpush.xpose.msra.mxu0 0.0
    %1233 = vmatpush.xpose.msra.mxu0 0.0
    %1234 = vmatpush.xpose.msra.mxu0 0.0
    %1235 = vmatpush.xpose.msra.mxu0 0.0
    %1236 = vmatpush.xpose.msra.mxu0 %v1221
    %1237 = vmatpush.xpose.msra.mxu0 %v1219
    %1238 = vmatpush.xpose.msra.mxu0 %v1217
    %1239 = vmatmul.f32.gmra.mxu0 %v1213
    %v1240 = vpop.f32.mrf.mxu0
    %v1241 = vadd.f32 0.0, %v1240
    %1242 = vmatmul.f32.gmra.mxu0 %v1215
    %v1243 = vpop.f32.mrf.mxu0
    %v1244 = vadd.f32 0.0, %v1243
    %1245 = vdwg.mxu0
    %v1246 = vmul.f32 %v1241, 0.35355338
    %v1247 = vmul.f32 %v1244, 0.35355338
    %v1248 = vadd.f32 %v1246, %v81
    %v1249 = vadd.f32 %v1247, %v82
    %v1250 = vsel %vm846, %v1248, -inf
    %1251 = vmax.xlane.f32.xlu0 %v1250
    %v1252 = vpop.xlane.xlu0 %1251
    %v1253 = vsel %vm846, %v1249, -inf
    %1254 = vmax.xlane.f32.xlu0 %v1253
    %v1255 = vpop.xlane.xlu0 %1254
    %v1256 = vsub.f32 %v1248, %v1252
    %v1257 = vsub.f32 %v1249, %v1255
    %v1258 = vmul.f32 %v1256, 1.442695
    %v1259 = vpow.pop %v1258
    %v1260 = vmul.f32 %v1257, 1.442695
    %v1261 = vpow.pop %v1260
    %v1262 = vsel %vm846, %v1259, 0.0
    %1263 = vadd.xlane.f32.xlu0 %v1262
    %v1264 = vpop.xlane.xlu0 %1263
    %v1265 = vsel %vm846, %v1261, 0.0
    %1266 = vadd.xlane.f32.xlu0 %v1265
    %v1267 = vpop.xlane.xlu0 %1266
    %v1268 = vrcp.pop %v1264
    %v1269 = vmul.f32 %v1264, %v1268
    %v1270 = vsub.f32 1.0, %v1269
    %v1271 = vmul.f32 %v1268, %v1270
    %v1272 = vadd.f32 %v1268, %v1271
    %vm1273 = vweird.f32 %v1264
    %vm1274 = vweird.f32 %v1268
    %vm1275 = vmor %vm1273, %vm1274
    %v1276 = vsel %vm1275, %v1268, %v1272
    %v1277 = vand.u32 2147483647, %v1264
    %vm1278 = vcmp.eq.f32.partialorder %v1277, 8.507059e+37
    %v1279 = vand.u32 %v1264, 2147483648
    %v1280 = vor.u32 1.1754944e-38, %v1279
    %v1281 = vsel %vm1278, %v1280, %v1276
    %v1282 = vmul.f32 %v1259, %v1281
    %v1283 = vrcp.pop %v1267
    %v1284 = vmul.f32 %v1267, %v1283
    %v1285 = vsub.f32 1.0, %v1284
    %v1286 = vmul.f32 %v1283, %v1285
    %v1287 = vadd.f32 %v1283, %v1286
    %vm1288 = vweird.f32 %v1267
    %vm1289 = vweird.f32 %v1283
    %vm1290 = vmor %vm1288, %vm1289
    %v1291 = vsel %vm1290, %v1283, %v1287
    %v1292 = vand.u32 2147483647, %v1267
    %vm1293 = vcmp.eq.f32.partialorder %v1292, 8.507059e+37
    %v1294 = vand.u32 %v1267, 2147483648
    %v1295 = vor.u32 1.1754944e-38, %v1294
    %v1296 = vsel %vm1293, %v1295, %v1291
    %v1297 = vmul.f32 %v1261, %v1296
    %1298 = vrot.lane.b32.xlu0 %v796, 72
    %v1299 = vpop.permute.xlu0 %1298
    %1300 = vrot.lane.b32.xlu0 %v799, 72
    %v1301 = vpop.permute.xlu0 %1300
    %1302 = vrot.lane.b32.xlu0 %v802, 72
    %v1303 = vpop.permute.xlu0 %1302
    %v1307 = vsel %vm846, %v1282, 0
    %v1310 = vsel %vm846, %v1297, 0
    %v1312 = vsel %vm909, %v1303, 0
    %1314 = vmatpush.msra.mxu0 0.0
    %1315 = vmatpush.msra.mxu0 0.0
    %1316 = vmatpush.msra.mxu0 0.0
    %1317 = vmatpush.msra.mxu0 0.0
    %1318 = vmatpush.msra.mxu0 0.0
    %1319 = vmatpush.msra.mxu0 0.0
    %1320 = vmatpush.msra.mxu0 0.0
    %1321 = vmatpush.msra.mxu0 0.0
    %1322 = vmatpush.msra.mxu0 0.0
    %1323 = vmatpush.msra.mxu0 0.0
    %1324 = vmatpush.msra.mxu0 0.0
    %1325 = vmatpush.msra.mxu0 0.0
    %1326 = vmatpush.msra.mxu0 0.0
    %1327 = vmatpush.msra.mxu0 %v1312
    %1328 = vmatpush.msra.mxu0 %v1301
    %1329 = vmatpush.msra.mxu0 %v1299
    %1330 = vmatmul.f32.gmra.mxu0 %v1307
    %v1331 = vpop.f32.mrf.mxu0
    %v1332 = vadd.f32 0.0, %v1331
    %1333 = vmatmul.f32.gmra.mxu0 %v1310
    %v1334 = vpop.f32.mrf.mxu0
    %v1335 = vadd.f32 0.0, %v1334
    %1336 = vdwg.mxu0
    %1339 = vrot.lane.b32.xlu0 %v1064, 8
    %v1340 = vpop.permute.xlu0 %1339
    %1341 = vrot.lane.b32.xlu0 %v1067, 8
    %v1342 = vpop.permute.xlu0 %1341
    %1347 = vrot.lane.b32.xlu0 %v1198, 16
    %v1348 = vpop.permute.xlu0 %1347
    %1349 = vrot.lane.b32.xlu0 %v1201, 16
    %v1350 = vpop.permute.xlu0 %1349
    %1355 = vrot.lane.b32.xlu0 %v1332, 24
    %v1356 = vpop.permute.xlu0 %1355
    %1357 = vrot.lane.b32.xlu0 %v1335, 24
    %v1358 = vpop.permute.xlu0 %1357
    %v1361 = vsel %vm120, %v930, %v1340
    %v1362 = vsel %vm120, %v933, %v1342
    %v1363 = vsel %vm156, %v1361, %v1348
    %v1364 = vsel %vm156, %v1362, %v1350
    %v1365 = vsel %vm646, %v1363, %v1356
    %v1366 = vsel %vm646, %v1364, %v1358
    %v1367 = vperm.slane %v58, 0
    %v1369 = vsel %vm84, %v1365, 0
    %v1372 = vsel %vm84, %v1366, 0
    %1374 = vmatpush.msra.mxu0 0.0
    %1375 = vmatpush.msra.mxu0 0.0
    %1376 = vmatpush.msra.mxu0 0.0
    %1377 = vmatpush.msra.mxu0 0.0
    %1378 = vmatpush.msra.mxu0 0.0
    %1379 = vmatpush.msra.mxu0 0.0
    %1380 = vmatpush.msra.mxu0 0.0
    %1381 = vmatpush.msra.mxu0 0.0
    %1382 = vmatpush.msra.mxu0 0.0
    %1383 = vmatpush.msra.mxu0 0.0
    %1384 = vmatpush.msra.mxu0 0.0
    %1385 = vmatpush.msra.mxu0 0.0
    %1386 = vmatpush.msra.mxu0 %v47
    %1387 = vmatpush.msra.mxu0 %v46
    %1388 = vmatpush.msra.mxu0 %v45
    %1389 = vmatpush.msra.mxu0 %v44
    %1390 = vmatmul.f32.gmra.mxu0 %v1369
    %v1391 = vpop.f32.mrf.mxu0
    %v1392 = vadd.f32 %v1367, %v1391
    %1393 = vmatmul.f32.gmra.mxu0 %v1372
    %v1394 = vpop.f32.mrf.mxu0
    %v1395 = vadd.f32 %v1367, %v1394
    %1396 = vdwg.mxu0
    %v1397 = vadd.f32 %v736, %v1392
    %v1398 = vadd.f32 %v737, %v1395
    %v1399 = vsel %vm84, %v1397, 0.0
    %1400 = vadd.xlane.f32.xlu0 %v1399
    %v1401 = vpop.xlane.xlu0 %1400
    %v1402 = vsel %vm84, %v1398, 0.0
    %1403 = vadd.xlane.f32.xlu0 %v1402
    %v1404 = vpop.xlane.xlu0 %1403
    %v1405 = vmul.f32 %v1401, %v693
    %v1406 = vmul.f32 %v1404, %v693
    %v1407 = vsub.f32 %v1397, %v1405
    %v1408 = vsub.f32 %v1398, %v1406
    %v1409 = vmul.f32 %v1407, %v1407
    %v1410 = vmul.f32 %v1408, %v1408
    %v1411 = vsel %vm84, %v1409, 0.0
    %1412 = vadd.xlane.f32.xlu0 %v1411
    %v1413 = vpop.xlane.xlu0 %1412
    %v1414 = vsel %vm84, %v1410, 0.0
    %1415 = vadd.xlane.f32.xlu0 %v1414
    %v1416 = vpop.xlane.xlu0 %1415
    %v1417 = vmul.f32 %v1413, %v693
    %v1418 = vmul.f32 %v1416, %v693
    %v1419 = vadd.f32 %v1417, 1e-05
    %v1420 = vadd.f32 %v1418, 1e-05
    %v1421 = vrsqrt.pop %v1419
    %v1422 = vmul.f32 %v1421, %v1419
    %v1423 = vmul.f32 %v1422, %v1421
    %v1424 = vmul.f32 0.5, %v1423
    %v1425 = vsub.f32 1.5, %v1424
    %v1426 = vmul.f32 %v1421, %v1425
    %vm1427 = vweird.f32 %v1419
    %vm1428 = vweird.f32 %v1421
    %vm1429 = vmor %vm1427, %vm1428
    %v1430 = vsel %vm1429, %v1421, %v1426
    %v1431 = vrsqrt.pop %v1420
    %v1432 = vmul.f32 %v1431, %v1420
    %v1433 = vmul.f32 %v1432, %v1431
    %v1434 = vmul.f32 0.5, %v1433
    %v1435 = vsub.f32 1.5, %v1434
    %v1436 = vmul.f32 %v1431, %v1435
    %vm1437 = vweird.f32 %v1420
    %vm1438 = vweird.f32 %v1431
    %vm1439 = vmor %vm1437, %vm1438
    %v1440 = vsel %vm1439, %v1431, %v1436
    %v1441 = vmul.f32 %v1407, %v1430
    %v1442 = vmul.f32 %v1408, %v1440
    %v1443 = vperm.slane %v62, 0
    %v1444 = vmul.f32 %v1441, %v1443
    %v1445 = vmul.f32 %v1442, %v1443
    %v1446 = vperm.slane %v63, 0
    %v1447 = vadd.f32 %v1444, %v1446
    %v1448 = vadd.f32 %v1445, %v1446
    %v1449 = vperm.slane %v35, 0
    %v1451 = vsel %vm84, %v1447, 0
    %v1454 = vsel %vm84, %v1448, 0
    %1456 = vmatpush.msra.mxu0 0.0
    %1457 = vmatpush.msra.mxu0 0.0
    %1458 = vmatpush.msra.mxu0 0.0
    %1459 = vmatpush.msra.mxu0 0.0
    %1460 = vmatpush.msra.mxu0 0.0
    %1461 = vmatpush.msra.mxu0 0.0
    %1462 = vmatpush.msra.mxu0 0.0
    %1463 = vmatpush.msra.mxu0 0.0
    %1464 = vmatpush.msra.mxu0 0.0
    %1465 = vmatpush.msra.mxu0 0.0
    %1466 = vmatpush.msra.mxu0 0.0
    %1467 = vmatpush.msra.mxu0 0.0
    %1468 = vmatpush.msra.mxu0 %v33
    %1469 = vmatpush.msra.mxu0 %v32
    %1470 = vmatpush.msra.mxu0 %v31
    %1471 = vmatpush.msra.mxu0 %v30
    %1472 = vmatmul.f32.gmra.mxu0 %v1451
    %v1473 = vpop.f32.mrf.mxu0
    %v1474 = vadd.f32 %v1449, %v1473
    %1475 = vmatmul.f32.gmra.mxu0 %v1454
    %v1476 = vpop.f32.mrf.mxu0
    %v1477 = vadd.f32 %v1449, %v1476
    %1478 = vdwg.mxu0
    %v1479 = vmax.f32 %v1474, 0.0
    %v1480 = vmax.f32 %v1477, 0.0
    %v1481 = vperm.slane %v59, 0
    %vm1482 = vcmask 523264
    %v1484 = vsel %vm1482, %v1479, 0
    %v1487 = vsel %vm1482, %v1480, 0
    %1489 = vmatpush.msra.mxu0 0.0
    %1490 = vmatpush.msra.mxu0 0.0
    %1491 = vmatpush.msra.mxu0 0.0
    %1492 = vmatpush.msra.mxu0 0.0
    %1493 = vmatpush.msra.mxu0 0.0
    %1494 = vmatpush.msra.mxu0 0.0
    %1495 = vmatpush.msra.mxu0 0.0
    %1496 = vmatpush.msra.mxu0 0.0
    %1497 = vmatpush.msra.mxu0 %v55
    %1498 = vmatpush.msra.mxu0 %v54
    %1499 = vmatpush.msra.mxu0 %v53
    %1500 = vmatpush.msra.mxu0 %v52
    %1501 = vmatpush.msra.mxu0 %v51
    %1502 = vmatpush.msra.mxu0 %v50
    %1503 = vmatpush.msra.mxu0 %v49
    %1504 = vmatpush.msra.mxu0 %v48
    %1505 = vmatmul.f32.gmra.mxu0 %v1484
    %v1506 = vpop.f32.mrf.mxu0
    %v1507 = vadd.f32 %v1481, %v1506
    %1508 = vmatmul.f32.gmra.mxu0 %v1487
    %v1509 = vpop.f32.mrf.mxu0
    %v1510 = vadd.f32 %v1481, %v1509
    %1511 = vdwg.mxu0
    %v1512 = vadd.f32 %v1447, %v1507
    %v1513 = vadd.f32 %v1448, %v1510
    %v1514 = vsel %vm84, %v1512, 0.0
    %1515 = vadd.xlane.f32.xlu0 %v1514
    %v1516 = vpop.xlane.xlu0 %1515
    %v1517 = vsel %vm84, %v1513, 0.0
    %1518 = vadd.xlane.f32.xlu0 %v1517
    %v1519 = vpop.xlane.xlu0 %1518
    %v1520 = vmul.f32 %v1516, %v693
    %v1521 = vmul.f32 %v1519, %v693
    %v1522 = vsub.f32 %v1512, %v1520
    %v1523 = vsub.f32 %v1513, %v1521
    %v1524 = vmul.f32 %v1522, %v1522
    %v1525 = vmul.f32 %v1523, %v1523
    %v1526 = vsel %vm84, %v1524, 0.0
    %1527 = vadd.xlane.f32.xlu0 %v1526
    %v1528 = vpop.xlane.xlu0 %1527
    %v1529 = vsel %vm84, %v1525, 0.0
    %1530 = vadd.xlane.f32.xlu0 %v1529
    %v1531 = vpop.xlane.xlu0 %1530
    %v1532 = vmul.f32 %v1528, %v693
    %v1533 = vmul.f32 %v1531, %v693
    %v1534 = vadd.f32 %v1532, 1e-05
    %v1535 = vadd.f32 %v1533, 1e-05
    %v1536 = vrsqrt.pop %v1534
    %v1537 = vmul.f32 %v1536, %v1534
    %v1538 = vmul.f32 %v1537, %v1536
    %v1539 = vmul.f32 0.5, %v1538
    %v1540 = vsub.f32 1.5, %v1539
    %v1541 = vmul.f32 %v1536, %v1540
    %vm1542 = vweird.f32 %v1534
    %vm1543 = vweird.f32 %v1536
    %vm1544 = vmor %vm1542, %vm1543
    %v1545 = vsel %vm1544, %v1536, %v1541
    %v1546 = vrsqrt.pop %v1535
    %v1547 = vmul.f32 %v1546, %v1535
    %v1548 = vmul.f32 %v1547, %v1546
    %v1549 = vmul.f32 0.5, %v1548
    %v1550 = vsub.f32 1.5, %v1549
    %v1551 = vmul.f32 %v1546, %v1550
    %vm1552 = vweird.f32 %v1535
    %vm1553 = vweird.f32 %v1546
    %vm1554 = vmor %vm1552, %vm1553
    %v1555 = vsel %vm1554, %v1546, %v1551
    %v1556 = vmul.f32 %v1522, %v1545
    %v1557 = vmul.f32 %v1523, %v1555
    %v1558 = vperm.slane %v64, 0
    %v1559 = vmul.f32 %v1556, %v1558
    %v1560 = vmul.f32 %v1557, %v1558
    %v1561 = vperm.slane %v65, 0
    %v1562 = vadd.f32 %v1559, %v1561
    %v1563 = vadd.f32 %v1560, %v1561
    %1564 = vst.msk [vmem:[#allocation2] sm:$0xff] %vm84, %v1562
    %1565 = vst.msk [vmem:[#allocation2 + $0x8] sm:$0xff] %vm84, %v1563
    // Predicated region
    $region22: #{transformer_decoder_layer.1} parent=1 // pred_check
      _
    $region23: #{transformer_decoder_layer.1} parent=1 // pred_check_branch
      %1567 = sbr.rel (0) target = $region25
    $region24: #{transformer_decoder_layer.1} parent=1 // pred_region
      %1569 = vsyncadd [#allocation3], 0
      %s1570 = sshll.u32 [#allocation2], 4
      %s1571 = int_to_ptr.vmem [resolvable:$true] %s1570
      %s1572 = sshll.u32 %s5, 4
      %s1573 = int_to_ptr.hbm [resolvable:$true] %s1572
      %1578 = dma.vmem_to_hbm [thread:$0]  %s1571, 256, %s1573, [#allocation3], 128, 128, 8
    $region25: #{transformer_decoder_layer.1} parent=1 // pred_fallthru
      _
    // Predicated region
    $region26: #{transformer_decoder_layer.1} parent=1 // pred_check
      _
    $region27: #{transformer_decoder_layer.1} parent=1 // pred_check_branch
      %1580 = sbr.rel (0) target = $region29
    $region28: #{transformer_decoder_layer.1} parent=1 // pred_region
      %1582 = dma.done [#allocation3], 256
    $region29: #{transformer_decoder_layer.1} parent=1 // pred_fallthru
      _
    %1583 = vsyncpa [#allocation3], 1

</llo_original>
